<compile_context>
chip_gen: v6e
topology: v6e:2x2x1
jax: 0.10.0
libtpu: 0.0.40
codegen_flags: <defaults>
</compile_context>

<pallas_src>
import functools
import math

import jax
import jax.numpy as jnp
from jax import lax
from jax.experimental import pallas as pl
from jax.experimental.pallas import tpu as pltpu


def _attn_kernel(x1_ref, x2_ref, wq_ref, wk_ref, bq_ref, bk_ref, o_ref):
    """One grid step: G packed heads, full (Lq, Lk) attention per head."""
    G, Lq, hidden = x1_ref.shape
    Lk = x2_ref.shape[1]
    d_model = wq_ref.shape[1]
    cdt = x1_ref.dtype            # matmul compute dtype (f32 or bf16)

    x1 = x1_ref[...]              # (G, Lq, hidden)
    x2 = x2_ref[...]              # (G, Lk, hidden)  (doubles as K-input and V)

    # ---- projections: pack heads so M = G*L fills the MXU rows ----
    q2 = jnp.dot(x1.reshape(G * Lq, hidden), wq_ref[...],
                 preferred_element_type=jnp.float32) + bq_ref[...]
    k2 = jnp.dot(x2.reshape(G * Lk, hidden), wk_ref[...],
                 preferred_element_type=jnp.float32) + bk_ref[...]

    q3 = q2.reshape(G, Lq, d_model).astype(cdt)
    k3 = k2.reshape(G, Lk, d_model).astype(cdt)

    # ---- scores: contract the d_model axes directly (no explicit k.T) ----
    scale = 1.0 / math.sqrt(d_model)
    s = lax.dot_general(
        q3, k3,
        dimension_numbers=(((2,), (2,)), ((0,), (0,))),
        preferred_element_type=jnp.float32) * scale        # (G, Lq, Lk) f32

    # ---- numerically stable softmax (f32 math; approx recip -> EUP slot) ----
    m = jnp.max(s, axis=-1, keepdims=True)
    p = jnp.exp(s - m)
    l = jnp.sum(p, axis=-1, keepdims=True)
    p = p * pl.reciprocal(l, approx=True)

    # ---- value matmul: softmax(scores) @ x2 ----
    out = lax.dot_general(
        p.astype(cdt), x2,
        dimension_numbers=(((2,), (1,)), ((0,), (0,))),
        preferred_element_type=jnp.float32)                # (G, Lq, hidden)

    o_ref[...] = out.astype(o_ref.dtype)


def _pick_group(bh, lq, lk, hidden, d_model, itemsize,
                target_rows=256, vmem_budget=28 * 1024 * 1024):
    """Largest G dividing bh with G*lq <= target_rows that also keeps the
    per-step VMEM footprint under a conservative budget."""
    g = max(1, min(bh, max(1, target_rows // max(lq, 1))))

    def fits(gg):
        weights = 2 * hidden * d_model * itemsize * 2           # 2 mats, dbl-buffered
        io = (gg * lq * hidden * (2 * itemsize + 2 * 4)         # x1 in + f32 out (dbl)
              + gg * lk * hidden * 2 * itemsize)                # x2 in (dbl)
        scratch = (gg * lq * lk * 4 * 2                         # scores + probs
                   + gg * (lq + lk) * d_model * 4               # q, k
                   + gg * lq * hidden * 4)                      # f32 out accum
        return weights + io + scratch <= vmem_budget

    while g > 1 and (bh % g != 0 or not fits(g)):
        g -= 1
    return g


@functools.partial(jax.jit, static_argnames=("compute_dtype",))
def attention_pallas(x1, x2, wq_t, bq, wk_t, bk, *, compute_dtype=None):
    """x1: (B, H, Lq, hidden), x2: (B, H, Lk, hidden)
       wq_t/wk_t: (hidden, d_model)  (already transposed, hoisted out of here)
       bq/bk: (d_model,)
       compute_dtype: None (use input dtype) or jnp.bfloat16 for fast matmuls."""
    B, H, Lq, hidden = x1.shape
    Lk = x2.shape[2]
    d_model = wq_t.shape[1]
    out_dtype = x1.dtype
    cdt = jnp.dtype(compute_dtype) if compute_dtype is not None else jnp.dtype(out_dtype)

    BH = B * H
    G = _pick_group(BH, Lq, Lk, hidden, d_model, cdt.itemsize)

    x1f = x1.reshape(BH, Lq, hidden).astype(cdt)
    x2f = x2.reshape(BH, Lk, hidden).astype(cdt)
    wq_c = wq_t.astype(cdt)
    wk_c = wk_t.astype(cdt)
    bq2 = bq.reshape(1, d_model).astype(jnp.float32)
    bk2 = bk.reshape(1, d_model).astype(jnp.float32)

    out = pl.pallas_call(
        _attn_kernel,
        out_shape=jax.ShapeDtypeStruct((BH, Lq, hidden), out_dtype),
        grid_spec=pltpu.PrefetchScalarGridSpec(
            num_scalar_prefetch=0,
            grid=(BH // G,),
            in_specs=[
                pl.BlockSpec((G, Lq, hidden), lambda g: (g, 0, 0)),
                pl.BlockSpec((G, Lk, hidden), lambda g: (g, 0, 0)),
                pl.BlockSpec((hidden, d_model), lambda g: (0, 0)),
                pl.BlockSpec((hidden, d_model), lambda g: (0, 0)),
                pl.BlockSpec((1, d_model), lambda g: (0, 0)),
                pl.BlockSpec((1, d_model), lambda g: (0, 0)),
            ],
            out_specs=pl.BlockSpec((G, Lq, hidden), lambda g: (g, 0, 0)),
        ),
        compiler_params=pltpu.CompilerParams(
            dimension_semantics=("parallel",),
        ),
    )(x1f, x2f, wq_c, wk_c, bq2, bk2)

    return out.reshape(B, H, Lq, hidden)


def attention_ref(x1, x2, wq, bq, wk, bk):
    """Pure-JAX reference in PyTorch Linear layout (weight (out, in))."""
    q = jnp.einsum("bhlf,mf->bhlm", x1, wq) + bq
    k = jnp.einsum("bhlf,mf->bhlm", x2, wk) + bk
    s = jnp.einsum("bhqm,bhkm->bhqk", q, k) / math.sqrt(q.shape[-1])
    p = jax.nn.softmax(s, axis=-1)
    return jnp.einsum("bhqk,bhkf->bhqf", p, x2)


if __name__ == "__main__":
    # Small shapes consistent with the module structure:
    #   x1: (B, H, Lq, hidden), x2: (B, H, Lk, hidden), Linear(hidden -> d_model)
    B, H = 1, 8
    Lq, Lk = 16, 64
    hidden_dim = 256
    d_model = 128

    key = jax.random.PRNGKey(0)
    k1, k2, k3, k4, k5, k6 = jax.random.split(key, 6)

    x1 = jax.random.normal(k1, (B, H, Lq, hidden_dim), dtype=jnp.float32)
    x2 = jax.random.normal(k2, (B, H, Lk, hidden_dim), dtype=jnp.float32)

    # PyTorch Linear layout: weight (out, in), bias (out,)
    bound = 1.0 / math.sqrt(hidden_dim)
    wq = jax.random.uniform(k3, (d_model, hidden_dim), minval=-bound, maxval=bound, dtype=jnp.float32)
    bq = jax.random.uniform(k4, (d_model,), minval=-bound, maxval=bound, dtype=jnp.float32)
    wk = jax.random.uniform(k5, (d_model, hidden_dim), minval=-bound, maxval=bound, dtype=jnp.float32)
    bk = jax.random.uniform(k6, (d_model,), minval=-bound, maxval=bound, dtype=jnp.float32)

    # Hoisted once at parameter-prep time (not per call).
    wq_t = wq.T                                   # (hidden, d_model)
    wk_t = wk.T

    ref = attention_ref(x1, x2, wq, bq, wk, bk)

    # f32 matmul path (default / v5e-friendly).
    out_f32 = attention_pallas(x1, x2, wq_t, bq, wk_t, bk)
    jax.block_until_ready(out_f32)
    assert out_f32.shape == (B, H, Lq, hidden_dim)
    assert jnp.allclose(out_f32, ref, atol=2e-3, rtol=2e-3), "f32 mismatch vs reference"

    # bf16 matmul path (f32 accumulation / f32 softmax) — v6e/v7x fast path.
    out_bf16 = attention_pallas(x1, x2, wq_t, bq, wk_t, bk, compute_dtype=jnp.bfloat16)
    jax.block_until_ready(out_bf16)
    assert jnp.allclose(out_bf16, ref, atol=5e-2, rtol=5e-2), "bf16 mismatch vs reference"

    print("KERNEL_OK")
</pallas_src>

<mosaic_0001>
module attributes {stable_mosaic.version = 11 : i64} {
  func.func @_attn_kernel(%arg0: i32, %arg1: memref<8x16x256xf32, #tpu.memory_space<vmem>>, %arg2: memref<8x64x256xf32, #tpu.memory_space<vmem>>, %arg3: memref<256x128xf32, #tpu.memory_space<vmem>>, %arg4: memref<256x128xf32, #tpu.memory_space<vmem>>, %arg5: memref<1x128xf32, #tpu.memory_space<vmem>>, %arg6: memref<1x128xf32, #tpu.memory_space<vmem>>, %arg7: memref<8x16x256xf32, #tpu.memory_space<vmem>>) attributes {dimension_semantics = [#tpu.dimension_semantics<parallel>], iteration_bounds = array<i64: 1>, scalar_prefetch = 0 : i64, scratch_operands = 0 : i64, tpu.core_type = #tpu.core_type<tc>, window_params = [{transform_indices = @transform_0, window_bounds = array<i64: 8, 16, 256>}, {transform_indices = @transform_1, window_bounds = array<i64: 8, 64, 256>}, {pipeline_mode = #tpu.pipeline_mode<synchronous>, transform_indices = @transform_2, window_bounds = array<i64: 256, 128>}, {pipeline_mode = #tpu.pipeline_mode<synchronous>, transform_indices = @transform_3, window_bounds = array<i64: 256, 128>}, {pipeline_mode = #tpu.pipeline_mode<synchronous>, transform_indices = @transform_4, window_bounds = array<i64: 1, 128>}, {pipeline_mode = #tpu.pipeline_mode<synchronous>, transform_indices = @transform_5, window_bounds = array<i64: 1, 128>}, {transform_indices = @transform_6, window_bounds = array<i64: 8, 16, 256>}]} {
    %c0 = arith.constant 0 : index
    %c0_0 = arith.constant 0 : index
    %c0_1 = arith.constant 0 : index
    %0 = vector.load %arg1[%c0, %c0_0, %c0_1] : memref<8x16x256xf32, #tpu.memory_space<vmem>>, vector<8x16x256xf32>
    %c0_2 = arith.constant 0 : index
    %c0_3 = arith.constant 0 : index
    %c0_4 = arith.constant 0 : index
    %1 = vector.load %arg2[%c0_2, %c0_3, %c0_4] : memref<8x64x256xf32, #tpu.memory_space<vmem>>, vector<8x64x256xf32>
    %2 = vector.shape_cast %0 : vector<8x16x256xf32> to vector<128x256xf32>
    %c0_5 = arith.constant 0 : index
    %c0_6 = arith.constant 0 : index
    %3 = vector.load %arg3[%c0_5, %c0_6] : memref<256x128xf32, #tpu.memory_space<vmem>>, vector<256x128xf32>
    %cst = arith.constant dense<0.000000e+00> : vector<128x128xf32>
    %4 = tpu.matmul %2, %3, %cst {dimension_numbers = #tpu.dot_dimension_numbers<[1], [0], [0], [1], [0, 0, 1, 1], [], []>} : vector<128x256xf32>, vector<256x128xf32>, vector<128x128xf32> -> vector<128x128xf32>
    %c0_7 = arith.constant 0 : index
    %c0_8 = arith.constant 0 : index
    %5 = vector.load %arg5[%c0_7, %c0_8] : memref<1x128xf32, #tpu.memory_space<vmem>>, vector<1x128xf32>
    %6 = vector.broadcast %5 : vector<1x128xf32> to vector<128x128xf32>
    %7 = arith.addf %4, %6 : vector<128x128xf32>
    %8 = vector.shape_cast %1 : vector<8x64x256xf32> to vector<512x256xf32>
    %c0_9 = arith.constant 0 : index
    %c0_10 = arith.constant 0 : index
    %9 = vector.load %arg4[%c0_9, %c0_10] : memref<256x128xf32, #tpu.memory_space<vmem>>, vector<256x128xf32>
    %cst_11 = arith.constant dense<0.000000e+00> : vector<512x128xf32>
    %10 = tpu.matmul %8, %9, %cst_11 {dimension_numbers = #tpu.dot_dimension_numbers<[1], [0], [0], [1], [0, 0, 1, 1], [], []>} : vector<512x256xf32>, vector<256x128xf32>, vector<512x128xf32> -> vector<512x128xf32>
    %c0_12 = arith.constant 0 : index
    %c0_13 = arith.constant 0 : index
    %11 = vector.load %arg6[%c0_12, %c0_13] : memref<1x128xf32, #tpu.memory_space<vmem>>, vector<1x128xf32>
    %12 = vector.broadcast %11 : vector<1x128xf32> to vector<512x128xf32>
    %13 = arith.addf %10, %12 : vector<512x128xf32>
    %14 = vector.shape_cast %7 : vector<128x128xf32> to vector<8x16x128xf32>
    %15 = vector.shape_cast %13 : vector<512x128xf32> to vector<8x64x128xf32>
    %cst_14 = arith.constant dense<0.000000e+00> : vector<8x16x64xf32>
    %16 = tpu.matmul %14, %15, %cst_14 {dimension_numbers = #tpu.dot_dimension_numbers<[2], [2], [1], [1], [0, 0, 0, 1, 1, 1], [0], [0]>} : vector<8x16x128xf32>, vector<8x64x128xf32>, vector<8x16x64xf32> -> vector<8x16x64xf32>
    %cst_15 = arith.constant 0.0883883461 : f32
    %17 = vector.broadcast %cst_15 : f32 to vector<8x16x64xf32>
    %18 = arith.mulf %16, %17 : vector<8x16x64xf32>
    %cst_16 = arith.constant dense<0xFF800000> : vector<8x16xf32>
    %19 = vector.multi_reduction <maximumf>, %18, %cst_16 [2] : vector<8x16x64xf32> to vector<8x16xf32>
    %20 = vector.shape_cast %19 : vector<8x16xf32> to vector<8x16x1xf32>
    %21 = vector.broadcast %20 : vector<8x16x1xf32> to vector<8x16x64xf32>
    %22 = arith.subf %18, %21 : vector<8x16x64xf32>
    %23 = math.exp %22 : vector<8x16x64xf32>
    %cst_17 = arith.constant dense<0.000000e+00> : vector<8x16xf32>
    %24 = vector.multi_reduction <add>, %23, %cst_17 [2] : vector<8x16x64xf32> to vector<8x16xf32>
    %25 = vector.shape_cast %24 : vector<8x16xf32> to vector<8x16x1xf32>
    %26 = tpu.reciprocal %25 {approx = true} : vector<8x16x1xf32> -> vector<8x16x1xf32>
    %27 = vector.broadcast %26 : vector<8x16x1xf32> to vector<8x16x64xf32>
    %28 = arith.mulf %23, %27 : vector<8x16x64xf32>
    %cst_18 = arith.constant dense<0.000000e+00> : vector<8x16x256xf32>
    %29 = tpu.matmul %28, %1, %cst_18 {dimension_numbers = #tpu.dot_dimension_numbers<[2], [1], [1], [2], [0, 0, 0, 1, 1, 2], [0], [0]>} : vector<8x16x64xf32>, vector<8x64x256xf32>, vector<8x16x256xf32> -> vector<8x16x256xf32>
    %c0_19 = arith.constant 0 : index
    %c0_20 = arith.constant 0 : index
    %c0_21 = arith.constant 0 : index
    %30 = vector.load %arg7[%c0_19, %c0_20, %c0_21] : memref<8x16x256xf32, #tpu.memory_space<vmem>>, vector<8x16x256xf32>
    tpu.vector_store %arg7[%c0_19, %c0_20, %c0_21], %29 {strides = array<i32>} : memref<8x16x256xf32, #tpu.memory_space<vmem>>, vector<8x16x256xf32>,
    return
  }
  func.func @transform_0(%arg0: i32) -> (i32, i32, i32) {
    %c0_i32 = arith.constant 0 : i32
    %c0_i32_0 = arith.constant 0 : i32
    %c0_i32_1 = arith.constant 0 : i32
    return %arg0, %c0_i32, %c0_i32_0 : i32, i32, i32
  }
  func.func @transform_1(%arg0: i32) -> (i32, i32, i32) {
    %c0_i32 = arith.constant 0 : i32
    %c0_i32_0 = arith.constant 0 : i32
    %c0_i32_1 = arith.constant 0 : i32
    return %arg0, %c0_i32, %c0_i32_0 : i32, i32, i32
  }
  func.func @transform_2(%arg0: i32) -> (i32, i32) {
    %c0_i32 = arith.constant 0 : i32
    %c0_i32_0 = arith.constant 0 : i32
    %c0_i32_1 = arith.constant 0 : i32
    return %c0_i32, %c0_i32_0 : i32, i32
  }
  func.func @transform_3(%arg0: i32) -> (i32, i32) {
    %c0_i32 = arith.constant 0 : i32
    %c0_i32_0 = arith.constant 0 : i32
    %c0_i32_1 = arith.constant 0 : i32
    return %c0_i32, %c0_i32_0 : i32, i32
  }
  func.func @transform_4(%arg0: i32) -> (i32, i32) {
    %c0_i32 = arith.constant 0 : i32
    %c0_i32_0 = arith.constant 0 : i32
    %c0_i32_1 = arith.constant 0 : i32
    return %c0_i32, %c0_i32_0 : i32, i32
  }
  func.func @transform_5(%arg0: i32) -> (i32, i32) {
    %c0_i32 = arith.constant 0 : i32
    %c0_i32_0 = arith.constant 0 : i32
    %c0_i32_1 = arith.constant 0 : i32
    return %c0_i32, %c0_i32_0 : i32, i32
  }
  func.func @transform_6(%arg0: i32) -> (i32, i32, i32) {
    %c0_i32 = arith.constant 0 : i32
    %c0_i32_0 = arith.constant 0 : i32
    %c0_i32_1 = arith.constant 0 : i32
    return %arg0, %c0_i32, %c0_i32_0 : i32, i32, i32
  }
}

</mosaic_0001>

<llo_original>
// kernel: attention_pallas.1
$region0: #{attention_pallas.1}
  #allocation0 [shape = 'u32[]', space=smem, size = 0x4, offset = 0x4, fixed_abs, tag = 'smem constant byte address 0x4 - core index']
  #allocation1 [shape = 'u32[144,128]{1,0:T(1,128)}', space=vmem, size = 0x12000, scoped, tag = 'internal scratch']
  %s0 = inlined_call_operand.hbm [shape: f32[8,16,256], index: 0, kind: input, shape index: {}]
  %s1 = inlined_call_operand.hbm [shape: f32[8,64,256], index: 1, kind: input, shape index: {}]
  %s2 = inlined_call_operand.hbm [shape: f32[256,128], index: 2, kind: input, shape index: {}]
  %s3 = inlined_call_operand.hbm [shape: f32[256,128], index: 3, kind: input, shape index: {}]
  %s4 = inlined_call_operand.vmem [shape: f32[1,128], index: 4, kind: input, shape index: {}]
  %s5 = inlined_call_operand.vmem [shape: f32[1,128], index: 5, kind: input, shape index: {}]
  %s6 = inlined_call_operand.hbm [shape: f32[8,16,256], index: 6, kind: output, shape index: {}]
  %s7 = sld [smem:[#allocation0]]
  $region50: #{attention_pallas.1} parent=0
    _
  %s9 = ssub.s32 1, %s7
  %s10 = scalar_select 0, %s9, %s7
  $region1: #{attention_pallas.1} parent=0
    #allocation2 [shape = 'u8[131072]{0}', space=vmem, size = 0x20000, scoped, tag = 'input window, operand 0, single buffered']
    #allocation3 [shape = 's32[1]{0}', space=sflag, size = 0x4, scoped, tag = 'scoped memory for attention_pallas.1']
    #allocation4 [shape = 's32[1]{0}', space=sflag, size = 0x4, scoped, tag = 'scoped memory for attention_pallas.1']
    #allocation5 [shape = 'u8[524288]{0}', space=vmem, size = 0x80000, scoped, tag = 'input window, operand 1, single buffered']
    #allocation6 [shape = 's32[1]{0}', space=sflag, size = 0x4, scoped, tag = 'scoped memory for attention_pallas.1']
    #allocation7 [shape = 'u8[131072]{0}', space=vmem, size = 0x20000, scoped, tag = 'input window, operand 2, single buffered']
    #allocation8 [shape = 'u8[131072]{0}', space=vmem, size = 0x20000, scoped, tag = 'input window, operand 3, single buffered']
    #allocation9 [shape = 's32[1]{0}', space=sflag, size = 0x4, scoped, tag = 'scoped memory for attention_pallas.1']
    #allocation10 [shape = 'u8[131072]{0}', space=vmem, size = 0x20000, scoped, tag = 'output window, operand 0, single buffered']
    %11 = vsyncpa [#allocation3], 0
    %12 = vsyncpa [#allocation6], 0
    %13 = vsyncpa [#allocation9], 0
    %14 = vsyncpa [#allocation4], 0
    // Predicated region
    $region2: #{attention_pallas.1} parent=1 // pred_check
      _
    $region3: #{attention_pallas.1} parent=1 // pred_check_branch
      %16 = sbr.rel (0) target = $region5
    $region4: #{attention_pallas.1} parent=1 // pred_region
      %s18 = ssub.s32 4096, 4096
      %19 = vsyncadd [#allocation3], %s18
      %s20 = sshll.u32 [#allocation2], 4
      %s21 = int_to_ptr.vmem [resolvable:$true] %s20
      %26 = dma.hbm_to_vmem [thread:$0]  %s0, 4096, %s21, [#allocation3], 256, 256, 16
    $region5: #{attention_pallas.1} parent=1 // pred_fallthru
      _
    // Predicated region
    $region6: #{attention_pallas.1} parent=1 // pred_check
      _
    $region7: #{attention_pallas.1} parent=1 // pred_check_branch
      %28 = sbr.rel (0) target = $region9
    $region8: #{attention_pallas.1} parent=1 // pred_region
      %s30 = ssub.s32 16384, 16384
      %31 = vsyncadd [#allocation6], %s30
      %s32 = sshll.u32 [#allocation5], 4
      %s33 = int_to_ptr.vmem [resolvable:$true] %s32
      %38 = dma.hbm_to_vmem [thread:$0]  %s1, 16384, %s33, [#allocation6], 256, 256, 16
    $region9: #{attention_pallas.1} parent=1 // pred_fallthru
      _
    // Predicated region
    $region10: #{attention_pallas.1} parent=1 // pred_check
      _
    $region11: #{attention_pallas.1} parent=1 // pred_check_branch
      %40 = sbr.rel (0) target = $region13
    $region12: #{attention_pallas.1} parent=1 // pred_region
      %s42 = ssub.s32 4096, 4096
      %43 = vsyncadd [#allocation6], %s42
      %s44 = sshll.u32 [#allocation7], 4
      %s45 = int_to_ptr.vmem [resolvable:$true] %s44
      %50 = dma.hbm_to_vmem [thread:$0]  %s2, 4096, %s45, [#allocation6], 128, 128, 8
    $region13: #{attention_pallas.1} parent=1 // pred_fallthru
      _
    // Predicated region
    $region14: #{attention_pallas.1} parent=1 // pred_check
      _
    $region15: #{attention_pallas.1} parent=1 // pred_check_branch
      %52 = sbr.rel (0) target = $region17
    $region16: #{attention_pallas.1} parent=1 // pred_region
      %s54 = ssub.s32 4096, 4096
      %55 = vsyncadd [#allocation9], %s54
      %s56 = sshll.u32 [#allocation8], 4
      %s57 = int_to_ptr.vmem [resolvable:$true] %s56
      %62 = dma.hbm_to_vmem [thread:$0]  %s3, 4096, %s57, [#allocation9], 128, 128, 8
    $region17: #{attention_pallas.1} parent=1 // pred_fallthru
      _
    // Predicated region
    $region18: #{attention_pallas.1} parent=1 // pred_check
      _
    $region19: #{attention_pallas.1} parent=1 // pred_check_branch
      %64 = sbr.rel (0) target = $region21
    $region20: #{attention_pallas.1} parent=1 // pred_region
      _
    $region21: #{attention_pallas.1} parent=1 // pred_fallthru
      _
    // Predicated region
    $region22: #{attention_pallas.1} parent=1 // pred_check
      _
    $region23: #{attention_pallas.1} parent=1 // pred_check_branch
      %66 = sbr.rel (0) target = $region25
    $region24: #{attention_pallas.1} parent=1 // pred_region
      _
    $region25: #{attention_pallas.1} parent=1 // pred_fallthru
      _
    // Predicated region
    $region26: #{attention_pallas.1} parent=1 // pred_check
      _
    $region27: #{attention_pallas.1} parent=1 // pred_check_branch
      %68 = sbr.rel (0) target = $region29
    $region28: #{attention_pallas.1} parent=1 // pred_region
      %69 = dma.done [#allocation3], 4096
    $region29: #{attention_pallas.1} parent=1 // pred_fallthru
      _
    // Predicated region
    $region30: #{attention_pallas.1} parent=1 // pred_check
      _
    $region31: #{attention_pallas.1} parent=1 // pred_check_branch
      %71 = sbr.rel (0) target = $region33
    $region32: #{attention_pallas.1} parent=1 // pred_region
      %72 = dma.done [#allocation6], 16384
    $region33: #{attention_pallas.1} parent=1 // pred_fallthru
      _
    // Predicated region
    $region34: #{attention_pallas.1} parent=1 // pred_check
      _
    $region35: #{attention_pallas.1} parent=1 // pred_check_branch
      %74 = sbr.rel (0) target = $region37
    $region36: #{attention_pallas.1} parent=1 // pred_region
      %75 = dma.done [#allocation6], 4096
    $region37: #{attention_pallas.1} parent=1 // pred_fallthru
      _
    // Predicated region
    $region38: #{attention_pallas.1} parent=1 // pred_check
      _
    $region39: #{attention_pallas.1} parent=1 // pred_check_branch
      %77 = sbr.rel (0) target = $region41
    $region40: #{attention_pallas.1} parent=1 // pred_region
      %78 = dma.done [#allocation9], 4096
    $region41: #{attention_pallas.1} parent=1 // pred_fallthru
      _
    %v79 = vld [vmem:[#allocation2] sm:$0xff]
    %v80 = vld [vmem:[#allocation2 + $0x8] sm:$0xff]
    %v81 = vld [vmem:[#allocation2 + $0x10] sm:$0xff]
    %v82 = vld [vmem:[#allocation2 + $0x18] sm:$0xff]
    %v83 = vld [vmem:[#allocation2 + $0x20] sm:$0xff]
    %v84 = vld [vmem:[#allocation2 + $0x28] sm:$0xff]
    %v85 = vld [vmem:[#allocation2 + $0x30] sm:$0xff]
    %v86 = vld [vmem:[#allocation2 + $0x38] sm:$0xff]
    %v87 = vld [vmem:[#allocation2 + $0x40] sm:$0xff]
    %v88 = vld [vmem:[#allocation2 + $0x48] sm:$0xff]
    %v89 = vld [vmem:[#allocation2 + $0x50] sm:$0xff]
    %v90 = vld [vmem:[#allocation2 + $0x58] sm:$0xff]
    %v91 = vld [vmem:[#allocation2 + $0x60] sm:$0xff]
    %v92 = vld [vmem:[#allocation2 + $0x68] sm:$0xff]
    %v93 = vld [vmem:[#allocation2 + $0x70] sm:$0xff]
    %v94 = vld [vmem:[#allocation2 + $0x78] sm:$0xff]
    %v95 = vld [vmem:[#allocation2 + $0x80] sm:$0xff]
    %v96 = vld [vmem:[#allocation2 + $0x88] sm:$0xff]
    %v97 = vld [vmem:[#allocation2 + $0x90] sm:$0xff]
    %v98 = vld [vmem:[#allocation2 + $0x98] sm:$0xff]
    %v99 = vld [vmem:[#allocation2 + $0xa0] sm:$0xff]
    %v100 = vld [vmem:[#allocation2 + $0xa8] sm:$0xff]
    %v101 = vld [vmem:[#allocation2 + $0xb0] sm:$0xff]
    %v102 = vld [vmem:[#allocation2 + $0xb8] sm:$0xff]
    %v103 = vld [vmem:[#allocation2 + $0xc0] sm:$0xff]
    %v104 = vld [vmem:[#allocation2 + $0xc8] sm:$0xff]
    %v105 = vld [vmem:[#allocation2 + $0xd0] sm:$0xff]
    %v106 = vld [vmem:[#allocation2 + $0xd8] sm:$0xff]
    %v107 = vld [vmem:[#allocation2 + $0xe0] sm:$0xff]
    %v108 = vld [vmem:[#allocation2 + $0xe8] sm:$0xff]
    %v109 = vld [vmem:[#allocation2 + $0xf0] sm:$0xff]
    %v110 = vld [vmem:[#allocation2 + $0xf8] sm:$0xff]
    %v111 = vld [vmem:[#allocation5] sm:$0xff]
    %v112 = vld [vmem:[#allocation5 + $0x8] sm:$0xff]
    %v113 = vld [vmem:[#allocation5 + $0x10] sm:$0xff]
    %v114 = vld [vmem:[#allocation5 + $0x18] sm:$0xff]
    %v115 = vld [vmem:[#allocation5 + $0x20] sm:$0xff]
    %v116 = vld [vmem:[#allocation5 + $0x28] sm:$0xff]
    %v117 = vld [vmem:[#allocation5 + $0x30] sm:$0xff]
    %v118 = vld [vmem:[#allocation5 + $0x38] sm:$0xff]
    %v119 = vld [vmem:[#allocation5 + $0x40] sm:$0xff]
    %v120 = vld [vmem:[#allocation5 + $0x48] sm:$0xff]
    %v121 = vld [vmem:[#allocation5 + $0x50] sm:$0xff]
    %v122 = vld [vmem:[#allocation5 + $0x58] sm:$0xff]
    %v123 = vld [vmem:[#allocation5 + $0x60] sm:$0xff]
    %v124 = vld [vmem:[#allocation5 + $0x68] sm:$0xff]
    %v125 = vld [vmem:[#allocation5 + $0x70] sm:$0xff]
    %v126 = vld [vmem:[#allocation5 + $0x78] sm:$0xff]
    %v127 = vld [vmem:[#allocation5 + $0x80] sm:$0xff]
    %v128 = vld [vmem:[#allocation5 + $0x88] sm:$0xff]
    %v129 = vld [vmem:[#allocation5 + $0x90] sm:$0xff]
    %v130 = vld [vmem:[#allocation5 + $0x98] sm:$0xff]
    %v131 = vld [vmem:[#allocation5 + $0xa0] sm:$0xff]
    %v132 = vld [vmem:[#allocation5 + $0xa8] sm:$0xff]
    %v133 = vld [vmem:[#allocation5 + $0xb0] sm:$0xff]
    %v134 = vld [vmem:[#allocation5 + $0xb8] sm:$0xff]
    %v135 = vld [vmem:[#allocation5 + $0xc0] sm:$0xff]
    %v136 = vld [vmem:[#allocation5 + $0xc8] sm:$0xff]
    %v137 = vld [vmem:[#allocation5 + $0xd0] sm:$0xff]
    %v138 = vld [vmem:[#allocation5 + $0xd8] sm:$0xff]
    %v139 = vld [vmem:[#allocation5 + $0xe0] sm:$0xff]
    %v140 = vld [vmem:[#allocation5 + $0xe8] sm:$0xff]
    %v141 = vld [vmem:[#allocation5 + $0xf0] sm:$0xff]
    %v142 = vld [vmem:[#allocation5 + $0xf8] sm:$0xff]
    %v143 = vld [vmem:[#allocation5 + $0x100] sm:$0xff]
    %v144 = vld [vmem:[#allocation5 + $0x108] sm:$0xff]
    %v145 = vld [vmem:[#allocation5 + $0x110] sm:$0xff]
    %v146 = vld [vmem:[#allocation5 + $0x118] sm:$0xff]
    %v147 = vld [vmem:[#allocation5 + $0x120] sm:$0xff]
    %v148 = vld [vmem:[#allocation5 + $0x128] sm:$0xff]
    %v149 = vld [vmem:[#allocation5 + $0x130] sm:$0xff]
    %v150 = vld [vmem:[#allocation5 + $0x138] sm:$0xff]
    %v151 = vld [vmem:[#allocation5 + $0x140] sm:$0xff]
    %v152 = vld [vmem:[#allocation5 + $0x148] sm:$0xff]
    %v153 = vld [vmem:[#allocation5 + $0x150] sm:$0xff]
    %v154 = vld [vmem:[#allocation5 + $0x158] sm:$0xff]
    %v155 = vld [vmem:[#allocation5 + $0x160] sm:$0xff]
    %v156 = vld [vmem:[#allocation5 + $0x168] sm:$0xff]
    %v157 = vld [vmem:[#allocation5 + $0x170] sm:$0xff]
    %v158 = vld [vmem:[#allocation5 + $0x178] sm:$0xff]
    %v159 = vld [vmem:[#allocation5 + $0x180] sm:$0xff]
    %v160 = vld [vmem:[#allocation5 + $0x188] sm:$0xff]
    %v161 = vld [vmem:[#allocation5 + $0x190] sm:$0xff]
    %v162 = vld [vmem:[#allocation5 + $0x198] sm:$0xff]
    %v163 = vld [vmem:[#allocation5 + $0x1a0] sm:$0xff]
    %v164 = vld [vmem:[#allocation5 + $0x1a8] sm:$0xff]
    %v165 = vld [vmem:[#allocation5 + $0x1b0] sm:$0xff]
    %v166 = vld [vmem:[#allocation5 + $0x1b8] sm:$0xff]
    %v167 = vld [vmem:[#allocation5 + $0x1c0] sm:$0xff]
    %v168 = vld [vmem:[#allocation5 + $0x1c8] sm:$0xff]
    %v169 = vld [vmem:[#allocation5 + $0x1d0] sm:$0xff]
    %v170 = vld [vmem:[#allocation5 + $0x1d8] sm:$0xff]
    %v171 = vld [vmem:[#allocation5 + $0x1e0] sm:$0xff]
    %v172 = vld [vmem:[#allocation5 + $0x1e8] sm:$0xff]
    %v173 = vld [vmem:[#allocation5 + $0x1f0] sm:$0xff]
    %v174 = vld [vmem:[#allocation5 + $0x1f8] sm:$0xff]
    %v175 = vld [vmem:[#allocation5 + $0x200] sm:$0xff]
    %v176 = vld [vmem:[#allocation5 + $0x208] sm:$0xff]
    %v177 = vld [vmem:[#allocation5 + $0x210] sm:$0xff]
    %v178 = vld [vmem:[#allocation5 + $0x218] sm:$0xff]
    %v179 = vld [vmem:[#allocation5 + $0x220] sm:$0xff]
    %v180 = vld [vmem:[#allocation5 + $0x228] sm:$0xff]
    %v181 = vld [vmem:[#allocation5 + $0x230] sm:$0xff]
    %v182 = vld [vmem:[#allocation5 + $0x238] sm:$0xff]
    %v183 = vld [vmem:[#allocation5 + $0x240] sm:$0xff]
    %v184 = vld [vmem:[#allocation5 + $0x248] sm:$0xff]
    %v185 = vld [vmem:[#allocation5 + $0x250] sm:$0xff]
    %v186 = vld [vmem:[#allocation5 + $0x258] sm:$0xff]
    %v187 = vld [vmem:[#allocation5 + $0x260] sm:$0xff]
    %v188 = vld [vmem:[#allocation5 + $0x268] sm:$0xff]
    %v189 = vld [vmem:[#allocation5 + $0x270] sm:$0xff]
    %v190 = vld [vmem:[#allocation5 + $0x278] sm:$0xff]
    %v191 = vld [vmem:[#allocation5 + $0x280] sm:$0xff]
    %v192 = vld [vmem:[#allocation5 + $0x288] sm:$0xff]
    %v193 = vld [vmem:[#allocation5 + $0x290] sm:$0xff]
    %v194 = vld [vmem:[#allocation5 + $0x298] sm:$0xff]
    %v195 = vld [vmem:[#allocation5 + $0x2a0] sm:$0xff]
    %v196 = vld [vmem:[#allocation5 + $0x2a8] sm:$0xff]
    %v197 = vld [vmem:[#allocation5 + $0x2b0] sm:$0xff]
    %v198 = vld [vmem:[#allocation5 + $0x2b8] sm:$0xff]
    %v199 = vld [vmem:[#allocation5 + $0x2c0] sm:$0xff]
    %v200 = vld [vmem:[#allocation5 + $0x2c8] sm:$0xff]
    %v201 = vld [vmem:[#allocation5 + $0x2d0] sm:$0xff]
    %v202 = vld [vmem:[#allocation5 + $0x2d8] sm:$0xff]
    %v203 = vld [vmem:[#allocation5 + $0x2e0] sm:$0xff]
    %v204 = vld [vmem:[#allocation5 + $0x2e8] sm:$0xff]
    %v205 = vld [vmem:[#allocation5 + $0x2f0] sm:$0xff]
    %v206 = vld [vmem:[#allocation5 + $0x2f8] sm:$0xff]
    %v207 = vld [vmem:[#allocation5 + $0x300] sm:$0xff]
    %v208 = vld [vmem:[#allocation5 + $0x308] sm:$0xff]
    %v209 = vld [vmem:[#allocation5 + $0x310] sm:$0xff]
    %v210 = vld [vmem:[#allocation5 + $0x318] sm:$0xff]
    %v211 = vld [vmem:[#allocation5 + $0x320] sm:$0xff]
    %v212 = vld [vmem:[#allocation5 + $0x328] sm:$0xff]
    %v213 = vld [vmem:[#allocation5 + $0x330] sm:$0xff]
    %v214 = vld [vmem:[#allocation5 + $0x338] sm:$0xff]
    %v215 = vld [vmem:[#allocation5 + $0x340] sm:$0xff]
    %v216 = vld [vmem:[#allocation5 + $0x348] sm:$0xff]
    %v217 = vld [vmem:[#allocation5 + $0x350] sm:$0xff]
    %v218 = vld [vmem:[#allocation5 + $0x358] sm:$0xff]
    %v219 = vld [vmem:[#allocation5 + $0x360] sm:$0xff]
    %v220 = vld [vmem:[#allocation5 + $0x368] sm:$0xff]
    %v221 = vld [vmem:[#allocation5 + $0x370] sm:$0xff]
    %v222 = vld [vmem:[#allocation5 + $0x378] sm:$0xff]
    %v223 = vld [vmem:[#allocation5 + $0x380] sm:$0xff]
    %v224 = vld [vmem:[#allocation5 + $0x388] sm:$0xff]
    %v225 = vld [vmem:[#allocation5 + $0x390] sm:$0xff]
    %v226 = vld [vmem:[#allocation5 + $0x398] sm:$0xff]
    %v227 = vld [vmem:[#allocation5 + $0x3a0] sm:$0xff]
    %v228 = vld [vmem:[#allocation5 + $0x3a8] sm:$0xff]
    %v229 = vld [vmem:[#allocation5 + $0x3b0] sm:$0xff]
    %v230 = vld [vmem:[#allocation5 + $0x3b8] sm:$0xff]
    %v231 = vld [vmem:[#allocation5 + $0x3c0] sm:$0xff]
    %v232 = vld [vmem:[#allocation5 + $0x3c8] sm:$0xff]
    %v233 = vld [vmem:[#allocation5 + $0x3d0] sm:$0xff]
    %v234 = vld [vmem:[#allocation5 + $0x3d8] sm:$0xff]
    %v235 = vld [vmem:[#allocation5 + $0x3e0] sm:$0xff]
    %v236 = vld [vmem:[#allocation5 + $0x3e8] sm:$0xff]
    %v237 = vld [vmem:[#allocation5 + $0x3f0] sm:$0xff]
    %v238 = vld [vmem:[#allocation5 + $0x3f8] sm:$0xff]
    %v239 = vld [vmem:[#allocation7] sm:$0xff]
    %v240 = vld [vmem:[#allocation7 + $0x8] sm:$0xff]
    %v241 = vld [vmem:[#allocation7 + $0x10] sm:$0xff]
    %v242 = vld [vmem:[#allocation7 + $0x18] sm:$0xff]
    %v243 = vld [vmem:[#allocation7 + $0x20] sm:$0xff]
    %v244 = vld [vmem:[#allocation7 + $0x28] sm:$0xff]
    %v245 = vld [vmem:[#allocation7 + $0x30] sm:$0xff]
    %v246 = vld [vmem:[#allocation7 + $0x38] sm:$0xff]
    %v247 = vld [vmem:[#allocation7 + $0x40] sm:$0xff]
    %v248 = vld [vmem:[#allocation7 + $0x48] sm:$0xff]
    %v249 = vld [vmem:[#allocation7 + $0x50] sm:$0xff]
    %v250 = vld [vmem:[#allocation7 + $0x58] sm:$0xff]
    %v251 = vld [vmem:[#allocation7 + $0x60] sm:$0xff]
    %v252 = vld [vmem:[#allocation7 + $0x68] sm:$0xff]
    %v253 = vld [vmem:[#allocation7 + $0x70] sm:$0xff]
    %v254 = vld [vmem:[#allocation7 + $0x78] sm:$0xff]
    %v255 = vld [vmem:[#allocation7 + $0x80] sm:$0xff]
    %v256 = vld [vmem:[#allocation7 + $0x88] sm:$0xff]
    %v257 = vld [vmem:[#allocation7 + $0x90] sm:$0xff]
    %v258 = vld [vmem:[#allocation7 + $0x98] sm:$0xff]
    %v259 = vld [vmem:[#allocation7 + $0xa0] sm:$0xff]
    %v260 = vld [vmem:[#allocation7 + $0xa8] sm:$0xff]
    %v261 = vld [vmem:[#allocation7 + $0xb0] sm:$0xff]
    %v262 = vld [vmem:[#allocation7 + $0xb8] sm:$0xff]
    %v263 = vld [vmem:[#allocation7 + $0xc0] sm:$0xff]
    %v264 = vld [vmem:[#allocation7 + $0xc8] sm:$0xff]
    %v265 = vld [vmem:[#allocation7 + $0xd0] sm:$0xff]
    %v266 = vld [vmem:[#allocation7 + $0xd8] sm:$0xff]
    %v267 = vld [vmem:[#allocation7 + $0xe0] sm:$0xff]
    %v268 = vld [vmem:[#allocation7 + $0xe8] sm:$0xff]
    %v269 = vld [vmem:[#allocation7 + $0xf0] sm:$0xff]
    %v270 = vld [vmem:[#allocation7 + $0xf8] sm:$0xff]
    %v271 = vld [vmem:[%s4] sm:$0x1]
    %v273 = vlaneseq
    %v274 = vshrl.u32 %v273, 7
    %v275 = vsub.s32 0, %v274
    %v276 = vrot.slane %v271, %v275
    %278 = vmatprep.subr.mxu0 0.0
    %279 = vmatpush1.msra.mxu0 %v254
    %280 = vmatprep.subr.mxu0 0.0
    %281 = vmatpush1.msra.mxu0 %v253
    %282 = vmatprep.subr.mxu0 0.0
    %283 = vmatpush1.msra.mxu0 %v252
    %284 = vmatprep.subr.mxu0 0.0
    %285 = vmatpush1.msra.mxu0 %v251
    %286 = vmatprep.subr.mxu0 0.0
    %287 = vmatpush1.msra.mxu0 %v250
    %288 = vmatprep.subr.mxu0 0.0
    %289 = vmatpush1.msra.mxu0 %v249
    %290 = vmatprep.subr.mxu0 0.0
    %291 = vmatpush1.msra.mxu0 %v248
    %292 = vmatprep.subr.mxu0 0.0
    %293 = vmatpush1.msra.mxu0 %v247
    %294 = vmatprep.subr.mxu0 0.0
    %295 = vmatpush1.msra.mxu0 %v246
    %296 = vmatprep.subr.mxu0 0.0
    %297 = vmatpush1.msra.mxu0 %v245
    %298 = vmatprep.subr.mxu0 0.0
    %299 = vmatpush1.msra.mxu0 %v244
    %300 = vmatprep.subr.mxu0 0.0
    %301 = vmatpush1.msra.mxu0 %v243
    %302 = vmatprep.subr.mxu0 0.0
    %303 = vmatpush1.msra.mxu0 %v242
    %304 = vmatprep.subr.mxu0 0.0
    %305 = vmatpush1.msra.mxu0 %v241
    %306 = vmatprep.subr.mxu0 0.0
    %307 = vmatpush1.msra.mxu0 %v240
    %308 = vmatprep.subr.mxu0 0.0
    %309 = vmatpush1.msra.mxu0 %v239
    %310 = vmatprep.subr.mxu0 0.0
    %311 = vmatpush2.msra.mxu0 %v270
    %312 = vmatprep.subr.mxu0 0.0
    %313 = vmatpush2.msra.mxu0 %v269
    %314 = vmatprep.subr.mxu0 0.0
    %315 = vmatpush2.msra.mxu0 %v268
    %316 = vmatprep.subr.mxu0 0.0
    %317 = vmatpush2.msra.mxu0 %v267
    %318 = vmatprep.subr.mxu0 0.0
    %319 = vmatpush2.msra.mxu0 %v266
    %320 = vmatprep.subr.mxu0 0.0
    %321 = vmatpush2.msra.mxu0 %v265
    %322 = vmatprep.subr.mxu0 0.0
    %323 = vmatpush2.msra.mxu0 %v264
    %324 = vmatprep.subr.mxu0 0.0
    %325 = vmatpush2.msra.mxu0 %v263
    %326 = vmatprep.subr.mxu0 0.0
    %327 = vmatpush2.msra.mxu0 %v262
    %328 = vmatprep.subr.mxu0 0.0
    %329 = vmatpush2.msra.mxu0 %v261
    %330 = vmatprep.subr.mxu0 0.0
    %331 = vmatpush2.msra.mxu0 %v260
    %332 = vmatprep.subr.mxu0 0.0
    %333 = vmatpush2.msra.mxu0 %v259
    %334 = vmatprep.subr.mxu0 0.0
    %335 = vmatpush2.msra.mxu0 %v258
    %336 = vmatprep.subr.mxu0 0.0
    %337 = vmatpush2.msra.mxu0 %v257
    %338 = vmatprep.subr.mxu0 0.0
    %339 = vmatpush2.msra.mxu0 %v256
    %340 = vmatprep.subr.mxu0 0.0
    %341 = vmatpush2.msra.mxu0 %v255
    %342 = vmatprep.mubr.f32.mxu0 %v80
    %343 = vmatmul.mubr.f32.gmra.mxu0 %v79
    %v344 = vpop.f32.mrf.mxu0
    %v345 = vadd.f32 %v276, %v344
    %v346 = vpop.f32.mrf.mxu0
    %347 = vmatprep.mubr.f32.mxu0 %v82
    %348 = vmatmul.mubr.f32.gmra.mxu0 %v81
    %v349 = vpop.f32.mrf.mxu0
    %v350 = vadd.f32 %v276, %v349
    %v351 = vpop.f32.mrf.mxu0
    %352 = vmatprep.mubr.f32.mxu0 %v84
    %353 = vmatmul.mubr.f32.gmra.mxu0 %v83
    %v354 = vpop.f32.mrf.mxu0
    %v355 = vadd.f32 %v276, %v354
    %v356 = vpop.f32.mrf.mxu0
    %357 = vmatprep.mubr.f32.mxu0 %v86
    %358 = vmatmul.mubr.f32.gmra.mxu0 %v85
    %v359 = vpop.f32.mrf.mxu0
    %v360 = vadd.f32 %v276, %v359
    %v361 = vpop.f32.mrf.mxu0
    %362 = vmatprep.mubr.f32.mxu0 %v88
    %363 = vmatmul.mubr.f32.gmra.mxu0 %v87
    %v364 = vpop.f32.mrf.mxu0
    %v365 = vadd.f32 %v276, %v364
    %v366 = vpop.f32.mrf.mxu0
    %367 = vmatprep.mubr.f32.mxu0 %v90
    %368 = vmatmul.mubr.f32.gmra.mxu0 %v89
    %v369 = vpop.f32.mrf.mxu0
    %v370 = vadd.f32 %v276, %v369
    %v371 = vpop.f32.mrf.mxu0
    %372 = vmatprep.mubr.f32.mxu0 %v92
    %373 = vmatmul.mubr.f32.gmra.mxu0 %v91
    %v374 = vpop.f32.mrf.mxu0
    %v375 = vadd.f32 %v276, %v374
    %v376 = vpop.f32.mrf.mxu0
    %377 = vmatprep.mubr.f32.mxu0 %v94
    %378 = vmatmul.mubr.f32.gmra.mxu0 %v93
    %v379 = vpop.f32.mrf.mxu0
    %v380 = vadd.f32 %v276, %v379
    %v381 = vpop.f32.mrf.mxu0
    %382 = vmatprep.mubr.f32.mxu0 %v96
    %383 = vmatmul.mubr.f32.gmra.mxu0 %v95
    %v384 = vpop.f32.mrf.mxu0
    %v385 = vadd.f32 %v276, %v384
    %v386 = vpop.f32.mrf.mxu0
    %387 = vmatprep.mubr.f32.mxu0 %v98
    %388 = vmatmul.mubr.f32.gmra.mxu0 %v97
    %v389 = vpop.f32.mrf.mxu0
    %v390 = vadd.f32 %v276, %v389
    %v391 = vpop.f32.mrf.mxu0
    %392 = vmatprep.mubr.f32.mxu0 %v100
    %393 = vmatmul.mubr.f32.gmra.mxu0 %v99
    %v394 = vpop.f32.mrf.mxu0
    %v395 = vadd.f32 %v276, %v394
    %v396 = vpop.f32.mrf.mxu0
    %397 = vmatprep.mubr.f32.mxu0 %v102
    %398 = vmatmul.mubr.f32.gmra.mxu0 %v101
    %v399 = vpop.f32.mrf.mxu0
    %v400 = vadd.f32 %v276, %v399
    %v401 = vpop.f32.mrf.mxu0
    %402 = vmatprep.mubr.f32.mxu0 %v104
    %403 = vmatmul.mubr.f32.gmra.mxu0 %v103
    %v404 = vpop.f32.mrf.mxu0
    %v405 = vadd.f32 %v276, %v404
    %v406 = vpop.f32.mrf.mxu0
    %407 = vmatprep.mubr.f32.mxu0 %v106
    %408 = vmatmul.mubr.f32.gmra.mxu0 %v105
    %v409 = vpop.f32.mrf.mxu0
    %v410 = vadd.f32 %v276, %v409
    %v411 = vpop.f32.mrf.mxu0
    %412 = vmatprep.mubr.f32.mxu0 %v108
    %413 = vmatmul.mubr.f32.gmra.mxu0 %v107
    %v414 = vpop.f32.mrf.mxu0
    %v415 = vadd.f32 %v276, %v414
    %v416 = vpop.f32.mrf.mxu0
    %417 = vmatprep.mubr.f32.mxu0 %v110
    %418 = vmatmul.mubr.f32.gmra.mxu0 %v109
    %v419 = vpop.f32.mrf.mxu0
    %v420 = vadd.f32 %v276, %v419
    %v421 = vpop.f32.mrf.mxu0
    %422 = vdwg.mxu0
    %v423 = vld [vmem:[#allocation8] sm:$0xff]
    %v424 = vld [vmem:[#allocation8 + $0x8] sm:$0xff]
    %v425 = vld [vmem:[#allocation8 + $0x10] sm:$0xff]
    %v426 = vld [vmem:[#allocation8 + $0x18] sm:$0xff]
    %v427 = vld [vmem:[#allocation8 + $0x20] sm:$0xff]
    %v428 = vld [vmem:[#allocation8 + $0x28] sm:$0xff]
    %v429 = vld [vmem:[#allocation8 + $0x30] sm:$0xff]
    %v430 = vld [vmem:[#allocation8 + $0x38] sm:$0xff]
    %v431 = vld [vmem:[#allocation8 + $0x40] sm:$0xff]
    %v432 = vld [vmem:[#allocation8 + $0x48] sm:$0xff]
    %v433 = vld [vmem:[#allocation8 + $0x50] sm:$0xff]
    %v434 = vld [vmem:[#allocation8 + $0x58] sm:$0xff]
    %v435 = vld [vmem:[#allocation8 + $0x60] sm:$0xff]
    %v436 = vld [vmem:[#allocation8 + $0x68] sm:$0xff]
    %v437 = vld [vmem:[#allocation8 + $0x70] sm:$0xff]
    %v438 = vld [vmem:[#allocation8 + $0x78] sm:$0xff]
    %v439 = vld [vmem:[#allocation8 + $0x80] sm:$0xff]
    %v440 = vld [vmem:[#allocation8 + $0x88] sm:$0xff]
    %v441 = vld [vmem:[#allocation8 + $0x90] sm:$0xff]
    %v442 = vld [vmem:[#allocation8 + $0x98] sm:$0xff]
    %v443 = vld [vmem:[#allocation8 + $0xa0] sm:$0xff]
    %v444 = vld [vmem:[#allocation8 + $0xa8] sm:$0xff]
    %v445 = vld [vmem:[#allocation8 + $0xb0] sm:$0xff]
    %v446 = vld [vmem:[#allocation8 + $0xb8] sm:$0xff]
    %v447 = vld [vmem:[#allocation8 + $0xc0] sm:$0xff]
    %v448 = vld [vmem:[#allocation8 + $0xc8] sm:$0xff]
    %v449 = vld [vmem:[#allocation8 + $0xd0] sm:$0xff]
    %v450 = vld [vmem:[#allocation8 + $0xd8] sm:$0xff]
    %v451 = vld [vmem:[#allocation8 + $0xe0] sm:$0xff]
    %v452 = vld [vmem:[#allocation8 + $0xe8] sm:$0xff]
    %v453 = vld [vmem:[#allocation8 + $0xf0] sm:$0xff]
    %v454 = vld [vmem:[#allocation8 + $0xf8] sm:$0xff]
    %v455 = vld [vmem:[%s5] sm:$0x1]
    %v457 = vlaneseq
    %v458 = vshrl.u32 %v457, 7
    %v459 = vsub.s32 0, %v458
    %v460 = vrot.slane %v455, %v459
    %462 = vmatprep.subr.mxu0 0.0
    %463 = vmatpush1.msra.mxu0 %v438
    %464 = vmatprep.subr.mxu0 0.0
    %465 = vmatpush1.msra.mxu0 %v437
    %466 = vmatprep.subr.mxu0 0.0
    %467 = vmatpush1.msra.mxu0 %v436
    %468 = vmatprep.subr.mxu0 0.0
    %469 = vmatpush1.msra.mxu0 %v435
    %470 = vmatprep.subr.mxu0 0.0
    %471 = vmatpush1.msra.mxu0 %v434
    %472 = vmatprep.subr.mxu0 0.0
    %473 = vmatpush1.msra.mxu0 %v433
    %474 = vmatprep.subr.mxu0 0.0
    %475 = vmatpush1.msra.mxu0 %v432
    %476 = vmatprep.subr.mxu0 0.0
    %477 = vmatpush1.msra.mxu0 %v431
    %478 = vmatprep.subr.mxu0 0.0
    %479 = vmatpush1.msra.mxu0 %v430
    %480 = vmatprep.subr.mxu0 0.0
    %481 = vmatpush1.msra.mxu0 %v429
    %482 = vmatprep.subr.mxu0 0.0
    %483 = vmatpush1.msra.mxu0 %v428
    %484 = vmatprep.subr.mxu0 0.0
    %485 = vmatpush1.msra.mxu0 %v427
    %486 = vmatprep.subr.mxu0 0.0
    %487 = vmatpush1.msra.mxu0 %v426
    %488 = vmatprep.subr.mxu0 0.0
    %489 = vmatpush1.msra.mxu0 %v425
    %490 = vmatprep.subr.mxu0 0.0
    %491 = vmatpush1.msra.mxu0 %v424
    %492 = vmatprep.subr.mxu0 0.0
    %493 = vmatpush1.msra.mxu0 %v423
    %494 = vmatprep.subr.mxu0 0.0
    %495 = vmatpush2.msra.mxu0 %v454
    %496 = vmatprep.subr.mxu0 0.0
    %497 = vmatpush2.msra.mxu0 %v453
    %498 = vmatprep.subr.mxu0 0.0
    %499 = vmatpush2.msra.mxu0 %v452
    %500 = vmatprep.subr.mxu0 0.0
    %501 = vmatpush2.msra.mxu0 %v451
    %502 = vmatprep.subr.mxu0 0.0
    %503 = vmatpush2.msra.mxu0 %v450
    %504 = vmatprep.subr.mxu0 0.0
    %505 = vmatpush2.msra.mxu0 %v449
    %506 = vmatprep.subr.mxu0 0.0
    %507 = vmatpush2.msra.mxu0 %v448
    %508 = vmatprep.subr.mxu0 0.0
    %509 = vmatpush2.msra.mxu0 %v447
    %510 = vmatprep.subr.mxu0 0.0
    %511 = vmatpush2.msra.mxu0 %v446
    %512 = vmatprep.subr.mxu0 0.0
    %513 = vmatpush2.msra.mxu0 %v445
    %514 = vmatprep.subr.mxu0 0.0
    %515 = vmatpush2.msra.mxu0 %v444
    %516 = vmatprep.subr.mxu0 0.0
    %517 = vmatpush2.msra.mxu0 %v443
    %518 = vmatprep.subr.mxu0 0.0
    %519 = vmatpush2.msra.mxu0 %v442
    %520 = vmatprep.subr.mxu0 0.0
    %521 = vmatpush2.msra.mxu0 %v441
    %522 = vmatprep.subr.mxu0 0.0
    %523 = vmatpush2.msra.mxu0 %v440
    %524 = vmatprep.subr.mxu0 0.0
    %525 = vmatpush2.msra.mxu0 %v439
    %526 = vmatprep.mubr.f32.mxu0 %v112
    %527 = vmatmul.mubr.f32.gmra.mxu0 %v111
    %v528 = vpop.f32.mrf.mxu0
    %v529 = vadd.f32 %v460, %v528
    %v530 = vpop.f32.mrf.mxu0
    %531 = vmatprep.mubr.f32.mxu0 %v114
    %532 = vmatmul.mubr.f32.gmra.mxu0 %v113
    %v533 = vpop.f32.mrf.mxu0
    %v534 = vadd.f32 %v460, %v533
    %v535 = vpop.f32.mrf.mxu0
    %536 = vmatprep.mubr.f32.mxu0 %v116
    %537 = vmatmul.mubr.f32.gmra.mxu0 %v115
    %v538 = vpop.f32.mrf.mxu0
    %v539 = vadd.f32 %v460, %v538
    %v540 = vpop.f32.mrf.mxu0
    %541 = vmatprep.mubr.f32.mxu0 %v118
    %542 = vmatmul.mubr.f32.gmra.mxu0 %v117
    %v543 = vpop.f32.mrf.mxu0
    %v544 = vadd.f32 %v460, %v543
    %v545 = vpop.f32.mrf.mxu0
    %546 = vmatprep.mubr.f32.mxu0 %v120
    %547 = vmatmul.mubr.f32.gmra.mxu0 %v119
    %v548 = vpop.f32.mrf.mxu0
    %v549 = vadd.f32 %v460, %v548
    %v550 = vpop.f32.mrf.mxu0
    %551 = vmatprep.mubr.f32.mxu0 %v122
    %552 = vmatmul.mubr.f32.gmra.mxu0 %v121
    %v553 = vpop.f32.mrf.mxu0
    %v554 = vadd.f32 %v460, %v553
    %v555 = vpop.f32.mrf.mxu0
    %556 = vmatprep.mubr.f32.mxu0 %v124
    %557 = vmatmul.mubr.f32.gmra.mxu0 %v123
    %v558 = vpop.f32.mrf.mxu0
    %v559 = vadd.f32 %v460, %v558
    %v560 = vpop.f32.mrf.mxu0
    %561 = vmatprep.mubr.f32.mxu0 %v126
    %562 = vmatmul.mubr.f32.gmra.mxu0 %v125
    %v563 = vpop.f32.mrf.mxu0
    %v564 = vadd.f32 %v460, %v563
    %v565 = vpop.f32.mrf.mxu0
    %566 = vmatprep.mubr.f32.mxu0 %v128
    %567 = vmatmul.mubr.f32.gmra.mxu0 %v127
    %v568 = vpop.f32.mrf.mxu0
    %v569 = vadd.f32 %v460, %v568
    %v570 = vpop.f32.mrf.mxu0
    %571 = vmatprep.mubr.f32.mxu0 %v130
    %572 = vmatmul.mubr.f32.gmra.mxu0 %v129
    %v573 = vpop.f32.mrf.mxu0
    %v574 = vadd.f32 %v460, %v573
    %v575 = vpop.f32.mrf.mxu0
    %576 = vmatprep.mubr.f32.mxu0 %v132
    %577 = vmatmul.mubr.f32.gmra.mxu0 %v131
    %v578 = vpop.f32.mrf.mxu0
    %v579 = vadd.f32 %v460, %v578
    %v580 = vpop.f32.mrf.mxu0
    %581 = vmatprep.mubr.f32.mxu0 %v134
    %582 = vmatmul.mubr.f32.gmra.mxu0 %v133
    %v583 = vpop.f32.mrf.mxu0
    %v584 = vadd.f32 %v460, %v583
    %v585 = vpop.f32.mrf.mxu0
    %586 = vmatprep.mubr.f32.mxu0 %v136
    %587 = vmatmul.mubr.f32.gmra.mxu0 %v135
    %v588 = vpop.f32.mrf.mxu0
    %v589 = vadd.f32 %v460, %v588
    %v590 = vpop.f32.mrf.mxu0
    %591 = vmatprep.mubr.f32.mxu0 %v138
    %592 = vmatmul.mubr.f32.gmra.mxu0 %v137
    %v593 = vpop.f32.mrf.mxu0
    %v594 = vadd.f32 %v460, %v593
    %v595 = vpop.f32.mrf.mxu0
    %596 = vmatprep.mubr.f32.mxu0 %v140
    %597 = vmatmul.mubr.f32.gmra.mxu0 %v139
    %v598 = vpop.f32.mrf.mxu0
    %v599 = vadd.f32 %v460, %v598
    %v600 = vpop.f32.mrf.mxu0
    %601 = vmatprep.mubr.f32.mxu0 %v142
    %602 = vmatmul.mubr.f32.gmra.mxu0 %v141
    %v603 = vpop.f32.mrf.mxu0
    %v604 = vadd.f32 %v460, %v603
    %v605 = vpop.f32.mrf.mxu0
    %606 = vmatprep.mubr.f32.mxu0 %v144
    %607 = vmatmul.mubr.f32.gmra.mxu0 %v143
    %v608 = vpop.f32.mrf.mxu0
    %v609 = vadd.f32 %v460, %v608
    %v610 = vpop.f32.mrf.mxu0
    %611 = vmatprep.mubr.f32.mxu0 %v146
    %612 = vmatmul.mubr.f32.gmra.mxu0 %v145
    %v613 = vpop.f32.mrf.mxu0
    %v614 = vadd.f32 %v460, %v613
    %v615 = vpop.f32.mrf.mxu0
    %616 = vmatprep.mubr.f32.mxu0 %v148
    %617 = vmatmul.mubr.f32.gmra.mxu0 %v147
    %v618 = vpop.f32.mrf.mxu0
    %v619 = vadd.f32 %v460, %v618
    %v620 = vpop.f32.mrf.mxu0
    %621 = vmatprep.mubr.f32.mxu0 %v150
    %622 = vmatmul.mubr.f32.gmra.mxu0 %v149
    %v623 = vpop.f32.mrf.mxu0
    %v624 = vadd.f32 %v460, %v623
    %v625 = vpop.f32.mrf.mxu0
    %626 = vmatprep.mubr.f32.mxu0 %v152
    %627 = vmatmul.mubr.f32.gmra.mxu0 %v151
    %v628 = vpop.f32.mrf.mxu0
    %v629 = vadd.f32 %v460, %v628
    %v630 = vpop.f32.mrf.mxu0
    %631 = vmatprep.mubr.f32.mxu0 %v154
    %632 = vmatmul.mubr.f32.gmra.mxu0 %v153
    %v633 = vpop.f32.mrf.mxu0
    %v634 = vadd.f32 %v460, %v633
    %v635 = vpop.f32.mrf.mxu0
    %636 = vmatprep.mubr.f32.mxu0 %v156
    %637 = vmatmul.mubr.f32.gmra.mxu0 %v155
    %v638 = vpop.f32.mrf.mxu0
    %v639 = vadd.f32 %v460, %v638
    %v640 = vpop.f32.mrf.mxu0
    %641 = vmatprep.mubr.f32.mxu0 %v158
    %642 = vmatmul.mubr.f32.gmra.mxu0 %v157
    %v643 = vpop.f32.mrf.mxu0
    %v644 = vadd.f32 %v460, %v643
    %v645 = vpop.f32.mrf.mxu0
    %646 = vmatprep.mubr.f32.mxu0 %v160
    %647 = vmatmul.mubr.f32.gmra.mxu0 %v159
    %v648 = vpop.f32.mrf.mxu0
    %v649 = vadd.f32 %v460, %v648
    %v650 = vpop.f32.mrf.mxu0
    %651 = vmatprep.mubr.f32.mxu0 %v162
    %652 = vmatmul.mubr.f32.gmra.mxu0 %v161
    %v653 = vpop.f32.mrf.mxu0
    %v654 = vadd.f32 %v460, %v653
    %v655 = vpop.f32.mrf.mxu0
    %656 = vmatprep.mubr.f32.mxu0 %v164
    %657 = vmatmul.mubr.f32.gmra.mxu0 %v163
    %v658 = vpop.f32.mrf.mxu0
    %v659 = vadd.f32 %v460, %v658
    %v660 = vpop.f32.mrf.mxu0
    %661 = vmatprep.mubr.f32.mxu0 %v166
    %662 = vmatmul.mubr.f32.gmra.mxu0 %v165
    %v663 = vpop.f32.mrf.mxu0
    %v664 = vadd.f32 %v460, %v663
    %v665 = vpop.f32.mrf.mxu0
    %666 = vmatprep.mubr.f32.mxu0 %v168
    %667 = vmatmul.mubr.f32.gmra.mxu0 %v167
    %v668 = vpop.f32.mrf.mxu0
    %v669 = vadd.f32 %v460, %v668
    %v670 = vpop.f32.mrf.mxu0
    %671 = vmatprep.mubr.f32.mxu0 %v170
    %672 = vmatmul.mubr.f32.gmra.mxu0 %v169
    %v673 = vpop.f32.mrf.mxu0
    %v674 = vadd.f32 %v460, %v673
    %v675 = vpop.f32.mrf.mxu0
    %676 = vmatprep.mubr.f32.mxu0 %v172
    %677 = vmatmul.mubr.f32.gmra.mxu0 %v171
    %v678 = vpop.f32.mrf.mxu0
    %v679 = vadd.f32 %v460, %v678
    %v680 = vpop.f32.mrf.mxu0
    %681 = vmatprep.mubr.f32.mxu0 %v174
    %682 = vmatmul.mubr.f32.gmra.mxu0 %v173
    %v683 = vpop.f32.mrf.mxu0
    %v684 = vadd.f32 %v460, %v683
    %v685 = vpop.f32.mrf.mxu0
    %686 = vmatprep.mubr.f32.mxu0 %v176
    %687 = vmatmul.mubr.f32.gmra.mxu0 %v175
    %v688 = vpop.f32.mrf.mxu0
    %v689 = vadd.f32 %v460, %v688
    %v690 = vpop.f32.mrf.mxu0
    %691 = vmatprep.mubr.f32.mxu0 %v178
    %692 = vmatmul.mubr.f32.gmra.mxu0 %v177
    %v693 = vpop.f32.mrf.mxu0
    %v694 = vadd.f32 %v460, %v693
    %v695 = vpop.f32.mrf.mxu0
    %696 = vmatprep.mubr.f32.mxu0 %v180
    %697 = vmatmul.mubr.f32.gmra.mxu0 %v179
    %v698 = vpop.f32.mrf.mxu0
    %v699 = vadd.f32 %v460, %v698
    %v700 = vpop.f32.mrf.mxu0
    %701 = vmatprep.mubr.f32.mxu0 %v182
    %702 = vmatmul.mubr.f32.gmra.mxu0 %v181
    %v703 = vpop.f32.mrf.mxu0
    %v704 = vadd.f32 %v460, %v703
    %v705 = vpop.f32.mrf.mxu0
    %706 = vmatprep.mubr.f32.mxu0 %v184
    %707 = vmatmul.mubr.f32.gmra.mxu0 %v183
    %v708 = vpop.f32.mrf.mxu0
    %v709 = vadd.f32 %v460, %v708
    %v710 = vpop.f32.mrf.mxu0
    %711 = vmatprep.mubr.f32.mxu0 %v186
    %712 = vmatmul.mubr.f32.gmra.mxu0 %v185
    %v713 = vpop.f32.mrf.mxu0
    %v714 = vadd.f32 %v460, %v713
    %v715 = vpop.f32.mrf.mxu0
    %716 = vmatprep.mubr.f32.mxu0 %v188
    %717 = vmatmul.mubr.f32.gmra.mxu0 %v187
    %v718 = vpop.f32.mrf.mxu0
    %v719 = vadd.f32 %v460, %v718
    %v720 = vpop.f32.mrf.mxu0
    %721 = vmatprep.mubr.f32.mxu0 %v190
    %722 = vmatmul.mubr.f32.gmra.mxu0 %v189
    %v723 = vpop.f32.mrf.mxu0
    %v724 = vadd.f32 %v460, %v723
    %v725 = vpop.f32.mrf.mxu0
    %726 = vmatprep.mubr.f32.mxu0 %v192
    %727 = vmatmul.mubr.f32.gmra.mxu0 %v191
    %v728 = vpop.f32.mrf.mxu0
    %v729 = vadd.f32 %v460, %v728
    %v730 = vpop.f32.mrf.mxu0
    %731 = vmatprep.mubr.f32.mxu0 %v194
    %732 = vmatmul.mubr.f32.gmra.mxu0 %v193
    %v733 = vpop.f32.mrf.mxu0
    %v734 = vadd.f32 %v460, %v733
    %v735 = vpop.f32.mrf.mxu0
    %736 = vmatprep.mubr.f32.mxu0 %v196
    %737 = vmatmul.mubr.f32.gmra.mxu0 %v195
    %v738 = vpop.f32.mrf.mxu0
    %v739 = vadd.f32 %v460, %v738
    %v740 = vpop.f32.mrf.mxu0
    %741 = vmatprep.mubr.f32.mxu0 %v198
    %742 = vmatmul.mubr.f32.gmra.mxu0 %v197
    %v743 = vpop.f32.mrf.mxu0
    %v744 = vadd.f32 %v460, %v743
    %v745 = vpop.f32.mrf.mxu0
    %746 = vmatprep.mubr.f32.mxu0 %v200
    %747 = vmatmul.mubr.f32.gmra.mxu0 %v199
    %v748 = vpop.f32.mrf.mxu0
    %v749 = vadd.f32 %v460, %v748
    %v750 = vpop.f32.mrf.mxu0
    %751 = vmatprep.mubr.f32.mxu0 %v202
    %752 = vmatmul.mubr.f32.gmra.mxu0 %v201
    %v753 = vpop.f32.mrf.mxu0
    %v754 = vadd.f32 %v460, %v753
    %v755 = vpop.f32.mrf.mxu0
    %756 = vmatprep.mubr.f32.mxu0 %v204
    %757 = vmatmul.mubr.f32.gmra.mxu0 %v203
    %v758 = vpop.f32.mrf.mxu0
    %v759 = vadd.f32 %v460, %v758
    %v760 = vpop.f32.mrf.mxu0
    %761 = vmatprep.mubr.f32.mxu0 %v206
    %762 = vmatmul.mubr.f32.gmra.mxu0 %v205
    %v763 = vpop.f32.mrf.mxu0
    %v764 = vadd.f32 %v460, %v763
    %v765 = vpop.f32.mrf.mxu0
    %766 = vmatprep.mubr.f32.mxu0 %v208
    %767 = vmatmul.mubr.f32.gmra.mxu0 %v207
    %v768 = vpop.f32.mrf.mxu0
    %v769 = vadd.f32 %v460, %v768
    %v770 = vpop.f32.mrf.mxu0
    %771 = vmatprep.mubr.f32.mxu0 %v210
    %772 = vmatmul.mubr.f32.gmra.mxu0 %v209
    %v773 = vpop.f32.mrf.mxu0
    %v774 = vadd.f32 %v460, %v773
    %v775 = vpop.f32.mrf.mxu0
    %776 = vmatprep.mubr.f32.mxu0 %v212
    %777 = vmatmul.mubr.f32.gmra.mxu0 %v211
    %v778 = vpop.f32.mrf.mxu0
    %v779 = vadd.f32 %v460, %v778
    %v780 = vpop.f32.mrf.mxu0
    %781 = vmatprep.mubr.f32.mxu0 %v214
    %782 = vmatmul.mubr.f32.gmra.mxu0 %v213
    %v783 = vpop.f32.mrf.mxu0
    %v784 = vadd.f32 %v460, %v783
    %v785 = vpop.f32.mrf.mxu0
    %786 = vmatprep.mubr.f32.mxu0 %v216
    %787 = vmatmul.mubr.f32.gmra.mxu0 %v215
    %v788 = vpop.f32.mrf.mxu0
    %v789 = vadd.f32 %v460, %v788
    %v790 = vpop.f32.mrf.mxu0
    %791 = vmatprep.mubr.f32.mxu0 %v218
    %792 = vmatmul.mubr.f32.gmra.mxu0 %v217
    %v793 = vpop.f32.mrf.mxu0
    %v794 = vadd.f32 %v460, %v793
    %v795 = vpop.f32.mrf.mxu0
    %796 = vmatprep.mubr.f32.mxu0 %v220
    %797 = vmatmul.mubr.f32.gmra.mxu0 %v219
    %v798 = vpop.f32.mrf.mxu0
    %v799 = vadd.f32 %v460, %v798
    %v800 = vpop.f32.mrf.mxu0
    %801 = vmatprep.mubr.f32.mxu0 %v222
    %802 = vmatmul.mubr.f32.gmra.mxu0 %v221
    %v803 = vpop.f32.mrf.mxu0
    %v804 = vadd.f32 %v460, %v803
    %v805 = vpop.f32.mrf.mxu0
    %806 = vmatprep.mubr.f32.mxu0 %v224
    %807 = vmatmul.mubr.f32.gmra.mxu0 %v223
    %v808 = vpop.f32.mrf.mxu0
    %v809 = vadd.f32 %v460, %v808
    %v810 = vpop.f32.mrf.mxu0
    %811 = vmatprep.mubr.f32.mxu0 %v226
    %812 = vmatmul.mubr.f32.gmra.mxu0 %v225
    %v813 = vpop.f32.mrf.mxu0
    %v814 = vadd.f32 %v460, %v813
    %v815 = vpop.f32.mrf.mxu0
    %816 = vmatprep.mubr.f32.mxu0 %v228
    %817 = vmatmul.mubr.f32.gmra.mxu0 %v227
    %v818 = vpop.f32.mrf.mxu0
    %v819 = vadd.f32 %v460, %v818
    %v820 = vpop.f32.mrf.mxu0
    %821 = vmatprep.mubr.f32.mxu0 %v230
    %822 = vmatmul.mubr.f32.gmra.mxu0 %v229
    %v823 = vpop.f32.mrf.mxu0
    %v824 = vadd.f32 %v460, %v823
    %v825 = vpop.f32.mrf.mxu0
    %826 = vmatprep.mubr.f32.mxu0 %v232
    %827 = vmatmul.mubr.f32.gmra.mxu0 %v231
    %v828 = vpop.f32.mrf.mxu0
    %v829 = vadd.f32 %v460, %v828
    %v830 = vpop.f32.mrf.mxu0
    %831 = vmatprep.mubr.f32.mxu0 %v234
    %832 = vmatmul.mubr.f32.gmra.mxu0 %v233
    %v833 = vpop.f32.mrf.mxu0
    %v834 = vadd.f32 %v460, %v833
    %v835 = vpop.f32.mrf.mxu0
    %836 = vmatprep.mubr.f32.mxu0 %v236
    %837 = vmatmul.mubr.f32.gmra.mxu0 %v235
    %v838 = vpop.f32.mrf.mxu0
    %v839 = vadd.f32 %v460, %v838
    %v840 = vpop.f32.mrf.mxu0
    %841 = vmatprep.mubr.f32.mxu0 %v238
    %842 = vmatmul.mubr.f32.gmra.mxu0 %v237
    %v843 = vpop.f32.mrf.mxu0
    %v844 = vadd.f32 %v460, %v843
    %v845 = vpop.f32.mrf.mxu0
    %846 = vdwg.mxu0
    %847 = vmatprep.subr.mxu0 0.0
    %848 = vmatpush1.xpose.msra.mxu0 0.0
    %849 = vmatprep.subr.mxu0 0.0
    %850 = vmatpush1.xpose.msra.mxu0 0.0
    %851 = vmatprep.subr.mxu0 0.0
    %852 = vmatpush1.xpose.msra.mxu0 0.0
    %853 = vmatprep.subr.mxu0 0.0
    %854 = vmatpush1.xpose.msra.mxu0 0.0
    %855 = vmatprep.subr.mxu0 0.0
    %856 = vmatpush1.xpose.msra.mxu0 0.0
    %857 = vmatprep.subr.mxu0 0.0
    %858 = vmatpush1.xpose.msra.mxu0 0.0
    %859 = vmatprep.subr.mxu0 0.0
    %860 = vmatpush1.xpose.msra.mxu0 0.0
    %861 = vmatprep.subr.mxu0 0.0
    %862 = vmatpush1.xpose.msra.mxu0 0.0
    %863 = vmatprep.subr.mxu0 0.0
    %864 = vmatpush1.xpose.msra.mxu0 %v564
    %865 = vmatprep.subr.mxu0 0.0
    %866 = vmatpush1.xpose.msra.mxu0 %v559
    %867 = vmatprep.subr.mxu0 0.0
    %868 = vmatpush1.xpose.msra.mxu0 %v554
    %869 = vmatprep.subr.mxu0 0.0
    %870 = vmatpush1.xpose.msra.mxu0 %v549
    %871 = vmatprep.subr.mxu0 0.0
    %872 = vmatpush1.xpose.msra.mxu0 %v544
    %873 = vmatprep.subr.mxu0 0.0
    %874 = vmatpush1.xpose.msra.mxu0 %v539
    %875 = vmatprep.subr.mxu0 0.0
    %876 = vmatpush1.xpose.msra.mxu0 %v534
    %877 = vmatprep.subr.mxu0 0.0
    %878 = vmatpush1.xpose.msra.mxu0 %v529
    %879 = vmatprep.subr.mxu0 0.0
    %880 = vmatpush2.xpose.msra.mxu0 0.0
    %881 = vmatprep.subr.mxu0 0.0
    %882 = vmatpush2.xpose.msra.mxu0 0.0
    %883 = vmatprep.subr.mxu0 0.0
    %884 = vmatpush2.xpose.msra.mxu0 0.0
    %885 = vmatprep.subr.mxu0 0.0
    %886 = vmatpush2.xpose.msra.mxu0 0.0
    %887 = vmatprep.subr.mxu0 0.0
    %888 = vmatpush2.xpose.msra.mxu0 0.0
    %889 = vmatprep.subr.mxu0 0.0
    %890 = vmatpush2.xpose.msra.mxu0 0.0
    %891 = vmatprep.subr.mxu0 0.0
    %892 = vmatpush2.xpose.msra.mxu0 0.0
    %893 = vmatprep.subr.mxu0 0.0
    %894 = vmatpush2.xpose.msra.mxu0 0.0
    %895 = vmatprep.subr.mxu0 0.0
    %896 = vmatpush2.xpose.msra.mxu0 0.0
    %897 = vmatprep.subr.mxu0 0.0
    %898 = vmatpush2.xpose.msra.mxu0 0.0
    %899 = vmatprep.subr.mxu0 0.0
    %900 = vmatpush2.xpose.msra.mxu0 0.0
    %901 = vmatprep.subr.mxu0 0.0
    %902 = vmatpush2.xpose.msra.mxu0 0.0
    %903 = vmatprep.subr.mxu0 0.0
    %904 = vmatpush2.xpose.msra.mxu0 0.0
    %905 = vmatprep.subr.mxu0 0.0
    %906 = vmatpush2.xpose.msra.mxu0 0.0
    %907 = vmatprep.subr.mxu0 0.0
    %908 = vmatpush2.xpose.msra.mxu0 0.0
    %909 = vmatprep.subr.mxu0 0.0
    %910 = vmatpush2.xpose.msra.mxu0 0.0
    %911 = vmatprep.mubr.f32.mxu0 0.0
    %912 = vmatmul.mubr.f32.gmra.mxu0 %v345
    %v913 = vpop.f32.mrf.mxu0
    %v914 = vadd.f32 0.0, %v913
    %v915 = vpop.f32.mrf.mxu0
    %916 = vmatprep.mubr.f32.mxu0 0.0
    %917 = vmatmul.mubr.f32.gmra.mxu0 %v350
    %v918 = vpop.f32.mrf.mxu0
    %v919 = vadd.f32 0.0, %v918
    %v920 = vpop.f32.mrf.mxu0
    %921 = vdwg.mxu0
    %922 = vmatprep.subr.mxu0 0.0
    %923 = vmatpush1.xpose.msra.mxu0 0.0
    %924 = vmatprep.subr.mxu0 0.0
    %925 = vmatpush1.xpose.msra.mxu0 0.0
    %926 = vmatprep.subr.mxu0 0.0
    %927 = vmatpush1.xpose.msra.mxu0 0.0
    %928 = vmatprep.subr.mxu0 0.0
    %929 = vmatpush1.xpose.msra.mxu0 0.0
    %930 = vmatprep.subr.mxu0 0.0
    %931 = vmatpush1.xpose.msra.mxu0 0.0
    %932 = vmatprep.subr.mxu0 0.0
    %933 = vmatpush1.xpose.msra.mxu0 0.0
    %934 = vmatprep.subr.mxu0 0.0
    %935 = vmatpush1.xpose.msra.mxu0 0.0
    %936 = vmatprep.subr.mxu0 0.0
    %937 = vmatpush1.xpose.msra.mxu0 0.0
    %938 = vmatprep.subr.mxu0 0.0
    %939 = vmatpush1.xpose.msra.mxu0 %v604
    %940 = vmatprep.subr.mxu0 0.0
    %941 = vmatpush1.xpose.msra.mxu0 %v599
    %942 = vmatprep.subr.mxu0 0.0
    %943 = vmatpush1.xpose.msra.mxu0 %v594
    %944 = vmatprep.subr.mxu0 0.0
    %945 = vmatpush1.xpose.msra.mxu0 %v589
    %946 = vmatprep.subr.mxu0 0.0
    %947 = vmatpush1.xpose.msra.mxu0 %v584
    %948 = vmatprep.subr.mxu0 0.0
    %949 = vmatpush1.xpose.msra.mxu0 %v579
    %950 = vmatprep.subr.mxu0 0.0
    %951 = vmatpush1.xpose.msra.mxu0 %v574
    %952 = vmatprep.subr.mxu0 0.0
    %953 = vmatpush1.xpose.msra.mxu0 %v569
    %954 = vmatprep.subr.mxu0 0.0
    %955 = vmatpush2.xpose.msra.mxu0 0.0
    %956 = vmatprep.subr.mxu0 0.0
    %957 = vmatpush2.xpose.msra.mxu0 0.0
    %958 = vmatprep.subr.mxu0 0.0
    %959 = vmatpush2.xpose.msra.mxu0 0.0
    %960 = vmatprep.subr.mxu0 0.0
    %961 = vmatpush2.xpose.msra.mxu0 0.0
    %962 = vmatprep.subr.mxu0 0.0
    %963 = vmatpush2.xpose.msra.mxu0 0.0
    %964 = vmatprep.subr.mxu0 0.0
    %965 = vmatpush2.xpose.msra.mxu0 0.0
    %966 = vmatprep.subr.mxu0 0.0
    %967 = vmatpush2.xpose.msra.mxu0 0.0
    %968 = vmatprep.subr.mxu0 0.0
    %969 = vmatpush2.xpose.msra.mxu0 0.0
    %970 = vmatprep.subr.mxu0 0.0
    %971 = vmatpush2.xpose.msra.mxu0 0.0
    %972 = vmatprep.subr.mxu0 0.0
    %973 = vmatpush2.xpose.msra.mxu0 0.0
    %974 = vmatprep.subr.mxu0 0.0
    %975 = vmatpush2.xpose.msra.mxu0 0.0
    %976 = vmatprep.subr.mxu0 0.0
    %977 = vmatpush2.xpose.msra.mxu0 0.0
    %978 = vmatprep.subr.mxu0 0.0
    %979 = vmatpush2.xpose.msra.mxu0 0.0
    %980 = vmatprep.subr.mxu0 0.0
    %981 = vmatpush2.xpose.msra.mxu0 0.0
    %982 = vmatprep.subr.mxu0 0.0
    %983 = vmatpush2.xpose.msra.mxu0 0.0
    %984 = vmatprep.subr.mxu0 0.0
    %985 = vmatpush2.xpose.msra.mxu0 0.0
    %986 = vmatprep.mubr.f32.mxu0 0.0
    %987 = vmatmul.mubr.f32.gmra.mxu0 %v355
    %v988 = vpop.f32.mrf.mxu0
    %v989 = vadd.f32 0.0, %v988
    %v990 = vpop.f32.mrf.mxu0
    %991 = vmatprep.mubr.f32.mxu0 0.0
    %992 = vmatmul.mubr.f32.gmra.mxu0 %v360
    %v993 = vpop.f32.mrf.mxu0
    %v994 = vadd.f32 0.0, %v993
    %v995 = vpop.f32.mrf.mxu0
    %996 = vdwg.mxu0
    %997 = vmatprep.subr.mxu0 0.0
    %998 = vmatpush1.xpose.msra.mxu0 0.0
    %999 = vmatprep.subr.mxu0 0.0
    %1000 = vmatpush1.xpose.msra.mxu0 0.0
    %1001 = vmatprep.subr.mxu0 0.0
    %1002 = vmatpush1.xpose.msra.mxu0 0.0
    %1003 = vmatprep.subr.mxu0 0.0
    %1004 = vmatpush1.xpose.msra.mxu0 0.0
    %1005 = vmatprep.subr.mxu0 0.0
    %1006 = vmatpush1.xpose.msra.mxu0 0.0
    %1007 = vmatprep.subr.mxu0 0.0
    %1008 = vmatpush1.xpose.msra.mxu0 0.0
    %1009 = vmatprep.subr.mxu0 0.0
    %1010 = vmatpush1.xpose.msra.mxu0 0.0
    %1011 = vmatprep.subr.mxu0 0.0
    %1012 = vmatpush1.xpose.msra.mxu0 0.0
    %1013 = vmatprep.subr.mxu0 0.0
    %1014 = vmatpush1.xpose.msra.mxu0 %v644
    %1015 = vmatprep.subr.mxu0 0.0
    %1016 = vmatpush1.xpose.msra.mxu0 %v639
    %1017 = vmatprep.subr.mxu0 0.0
    %1018 = vmatpush1.xpose.msra.mxu0 %v634
    %1019 = vmatprep.subr.mxu0 0.0
    %1020 = vmatpush1.xpose.msra.mxu0 %v629
    %1021 = vmatprep.subr.mxu0 0.0
    %1022 = vmatpush1.xpose.msra.mxu0 %v624
    %1023 = vmatprep.subr.mxu0 0.0
    %1024 = vmatpush1.xpose.msra.mxu0 %v619
    %1025 = vmatprep.subr.mxu0 0.0
    %1026 = vmatpush1.xpose.msra.mxu0 %v614
    %1027 = vmatprep.subr.mxu0 0.0
    %1028 = vmatpush1.xpose.msra.mxu0 %v609
    %1029 = vmatprep.subr.mxu0 0.0
    %1030 = vmatpush2.xpose.msra.mxu0 0.0
    %1031 = vmatprep.subr.mxu0 0.0
    %1032 = vmatpush2.xpose.msra.mxu0 0.0
    %1033 = vmatprep.subr.mxu0 0.0
    %1034 = vmatpush2.xpose.msra.mxu0 0.0
    %1035 = vmatprep.subr.mxu0 0.0
    %1036 = vmatpush2.xpose.msra.mxu0 0.0
    %1037 = vmatprep.subr.mxu0 0.0
    %1038 = vmatpush2.xpose.msra.mxu0 0.0
    %1039 = vmatprep.subr.mxu0 0.0
    %1040 = vmatpush2.xpose.msra.mxu0 0.0
    %1041 = vmatprep.subr.mxu0 0.0
    %1042 = vmatpush2.xpose.msra.mxu0 0.0
    %1043 = vmatprep.subr.mxu0 0.0
    %1044 = vmatpush2.xpose.msra.mxu0 0.0
    %1045 = vmatprep.subr.mxu0 0.0
    %1046 = vmatpush2.xpose.msra.mxu0 0.0
    %1047 = vmatprep.subr.mxu0 0.0
    %1048 = vmatpush2.xpose.msra.mxu0 0.0
    %1049 = vmatprep.subr.mxu0 0.0
    %1050 = vmatpush2.xpose.msra.mxu0 0.0
    %1051 = vmatprep.subr.mxu0 0.0
    %1052 = vmatpush2.xpose.msra.mxu0 0.0
    %1053 = vmatprep.subr.mxu0 0.0
    %1054 = vmatpush2.xpose.msra.mxu0 0.0
    %1055 = vmatprep.subr.mxu0 0.0
    %1056 = vmatpush2.xpose.msra.mxu0 0.0
    %1057 = vmatprep.subr.mxu0 0.0
    %1058 = vmatpush2.xpose.msra.mxu0 0.0
    %1059 = vmatprep.subr.mxu0 0.0
    %1060 = vmatpush2.xpose.msra.mxu0 0.0
    %1061 = vmatprep.mubr.f32.mxu0 0.0
    %1062 = vmatmul.mubr.f32.gmra.mxu0 %v365
    %v1063 = vpop.f32.mrf.mxu0
    %v1064 = vadd.f32 0.0, %v1063
    %v1065 = vpop.f32.mrf.mxu0
    %1066 = vmatprep.mubr.f32.mxu0 0.0
    %1067 = vmatmul.mubr.f32.gmra.mxu0 %v370
    %v1068 = vpop.f32.mrf.mxu0
    %v1069 = vadd.f32 0.0, %v1068
    %v1070 = vpop.f32.mrf.mxu0
    %1071 = vdwg.mxu0
    %1072 = vmatprep.subr.mxu0 0.0
    %1073 = vmatpush1.xpose.msra.mxu0 0.0
    %1074 = vmatprep.subr.mxu0 0.0
    %1075 = vmatpush1.xpose.msra.mxu0 0.0
    %1076 = vmatprep.subr.mxu0 0.0
    %1077 = vmatpush1.xpose.msra.mxu0 0.0
    %1078 = vmatprep.subr.mxu0 0.0
    %1079 = vmatpush1.xpose.msra.mxu0 0.0
    %1080 = vmatprep.subr.mxu0 0.0
    %1081 = vmatpush1.xpose.msra.mxu0 0.0
    %1082 = vmatprep.subr.mxu0 0.0
    %1083 = vmatpush1.xpose.msra.mxu0 0.0
    %1084 = vmatprep.subr.mxu0 0.0
    %1085 = vmatpush1.xpose.msra.mxu0 0.0
    %1086 = vmatprep.subr.mxu0 0.0
    %1087 = vmatpush1.xpose.msra.mxu0 0.0
    %1088 = vmatprep.subr.mxu0 0.0
    %1089 = vmatpush1.xpose.msra.mxu0 %v684
    %1090 = vmatprep.subr.mxu0 0.0
    %1091 = vmatpush1.xpose.msra.mxu0 %v679
    %1092 = vmatprep.subr.mxu0 0.0
    %1093 = vmatpush1.xpose.msra.mxu0 %v674
    %1094 = vmatprep.subr.mxu0 0.0
    %1095 = vmatpush1.xpose.msra.mxu0 %v669
    %1096 = vmatprep.subr.mxu0 0.0
    %1097 = vmatpush1.xpose.msra.mxu0 %v664
    %1098 = vmatprep.subr.mxu0 0.0
    %1099 = vmatpush1.xpose.msra.mxu0 %v659
    %1100 = vmatprep.subr.mxu0 0.0
    %1101 = vmatpush1.xpose.msra.mxu0 %v654
    %1102 = vmatprep.subr.mxu0 0.0
    %1103 = vmatpush1.xpose.msra.mxu0 %v649
    %1104 = vmatprep.subr.mxu0 0.0
    %1105 = vmatpush2.xpose.msra.mxu0 0.0
    %1106 = vmatprep.subr.mxu0 0.0
    %1107 = vmatpush2.xpose.msra.mxu0 0.0
    %1108 = vmatprep.subr.mxu0 0.0
    %1109 = vmatpush2.xpose.msra.mxu0 0.0
    %1110 = vmatprep.subr.mxu0 0.0
    %1111 = vmatpush2.xpose.msra.mxu0 0.0
    %1112 = vmatprep.subr.mxu0 0.0
    %1113 = vmatpush2.xpose.msra.mxu0 0.0
    %1114 = vmatprep.subr.mxu0 0.0
    %1115 = vmatpush2.xpose.msra.mxu0 0.0
    %1116 = vmatprep.subr.mxu0 0.0
    %1117 = vmatpush2.xpose.msra.mxu0 0.0
    %1118 = vmatprep.subr.mxu0 0.0
    %1119 = vmatpush2.xpose.msra.mxu0 0.0
    %1120 = vmatprep.subr.mxu0 0.0
    %1121 = vmatpush2.xpose.msra.mxu0 0.0
    %1122 = vmatprep.subr.mxu0 0.0
    %1123 = vmatpush2.xpose.msra.mxu0 0.0
    %1124 = vmatprep.subr.mxu0 0.0
    %1125 = vmatpush2.xpose.msra.mxu0 0.0
    %1126 = vmatprep.subr.mxu0 0.0
    %1127 = vmatpush2.xpose.msra.mxu0 0.0
    %1128 = vmatprep.subr.mxu0 0.0
    %1129 = vmatpush2.xpose.msra.mxu0 0.0
    %1130 = vmatprep.subr.mxu0 0.0
    %1131 = vmatpush2.xpose.msra.mxu0 0.0
    %1132 = vmatprep.subr.mxu0 0.0
    %1133 = vmatpush2.xpose.msra.mxu0 0.0
    %1134 = vmatprep.subr.mxu0 0.0
    %1135 = vmatpush2.xpose.msra.mxu0 0.0
    %1136 = vmatprep.mubr.f32.mxu0 0.0
    %1137 = vmatmul.mubr.f32.gmra.mxu0 %v375
    %v1138 = vpop.f32.mrf.mxu0
    %v1139 = vadd.f32 0.0, %v1138
    %v1140 = vpop.f32.mrf.mxu0
    %1141 = vmatprep.mubr.f32.mxu0 0.0
    %1142 = vmatmul.mubr.f32.gmra.mxu0 %v380
    %v1143 = vpop.f32.mrf.mxu0
    %v1144 = vadd.f32 0.0, %v1143
    %v1145 = vpop.f32.mrf.mxu0
    %1146 = vdwg.mxu0
    %1147 = vmatprep.subr.mxu0 0.0
    %1148 = vmatpush1.xpose.msra.mxu0 0.0
    %1149 = vmatprep.subr.mxu0 0.0
    %1150 = vmatpush1.xpose.msra.mxu0 0.0
    %1151 = vmatprep.subr.mxu0 0.0
    %1152 = vmatpush1.xpose.msra.mxu0 0.0
    %1153 = vmatprep.subr.mxu0 0.0
    %1154 = vmatpush1.xpose.msra.mxu0 0.0
    %1155 = vmatprep.subr.mxu0 0.0
    %1156 = vmatpush1.xpose.msra.mxu0 0.0
    %1157 = vmatprep.subr.mxu0 0.0
    %1158 = vmatpush1.xpose.msra.mxu0 0.0
    %1159 = vmatprep.subr.mxu0 0.0
    %1160 = vmatpush1.xpose.msra.mxu0 0.0
    %1161 = vmatprep.subr.mxu0 0.0
    %1162 = vmatpush1.xpose.msra.mxu0 0.0
    %1163 = vmatprep.subr.mxu0 0.0
    %1164 = vmatpush1.xpose.msra.mxu0 %v724
    %1165 = vmatprep.subr.mxu0 0.0
    %1166 = vmatpush1.xpose.msra.mxu0 %v719
    %1167 = vmatprep.subr.mxu0 0.0
    %1168 = vmatpush1.xpose.msra.mxu0 %v714
    %1169 = vmatprep.subr.mxu0 0.0
    %1170 = vmatpush1.xpose.msra.mxu0 %v709
    %1171 = vmatprep.subr.mxu0 0.0
    %1172 = vmatpush1.xpose.msra.mxu0 %v704
    %1173 = vmatprep.subr.mxu0 0.0
    %1174 = vmatpush1.xpose.msra.mxu0 %v699
    %1175 = vmatprep.subr.mxu0 0.0
    %1176 = vmatpush1.xpose.msra.mxu0 %v694
    %1177 = vmatprep.subr.mxu0 0.0
    %1178 = vmatpush1.xpose.msra.mxu0 %v689
    %1179 = vmatprep.subr.mxu0 0.0
    %1180 = vmatpush2.xpose.msra.mxu0 0.0
    %1181 = vmatprep.subr.mxu0 0.0
    %1182 = vmatpush2.xpose.msra.mxu0 0.0
    %1183 = vmatprep.subr.mxu0 0.0
    %1184 = vmatpush2.xpose.msra.mxu0 0.0
    %1185 = vmatprep.subr.mxu0 0.0
    %1186 = vmatpush2.xpose.msra.mxu0 0.0
    %1187 = vmatprep.subr.mxu0 0.0
    %1188 = vmatpush2.xpose.msra.mxu0 0.0
    %1189 = vmatprep.subr.mxu0 0.0
    %1190 = vmatpush2.xpose.msra.mxu0 0.0
    %1191 = vmatprep.subr.mxu0 0.0
    %1192 = vmatpush2.xpose.msra.mxu0 0.0
    %1193 = vmatprep.subr.mxu0 0.0
    %1194 = vmatpush2.xpose.msra.mxu0 0.0
    %1195 = vmatprep.subr.mxu0 0.0
    %1196 = vmatpush2.xpose.msra.mxu0 0.0
    %1197 = vmatprep.subr.mxu0 0.0
    %1198 = vmatpush2.xpose.msra.mxu0 0.0
    %1199 = vmatprep.subr.mxu0 0.0
    %1200 = vmatpush2.xpose.msra.mxu0 0.0
    %1201 = vmatprep.subr.mxu0 0.0
    %1202 = vmatpush2.xpose.msra.mxu0 0.0
    %1203 = vmatprep.subr.mxu0 0.0
    %1204 = vmatpush2.xpose.msra.mxu0 0.0
    %1205 = vmatprep.subr.mxu0 0.0
    %1206 = vmatpush2.xpose.msra.mxu0 0.0
    %1207 = vmatprep.subr.mxu0 0.0
    %1208 = vmatpush2.xpose.msra.mxu0 0.0
    %1209 = vmatprep.subr.mxu0 0.0
    %1210 = vmatpush2.xpose.msra.mxu0 0.0
    %1211 = vmatprep.mubr.f32.mxu0 0.0
    %1212 = vmatmul.mubr.f32.gmra.mxu0 %v385
    %v1213 = vpop.f32.mrf.mxu0
    %v1214 = vadd.f32 0.0, %v1213
    %v1215 = vpop.f32.mrf.mxu0
    %1216 = vmatprep.mubr.f32.mxu0 0.0
    %1217 = vmatmul.mubr.f32.gmra.mxu0 %v390
    %v1218 = vpop.f32.mrf.mxu0
    %v1219 = vadd.f32 0.0, %v1218
    %v1220 = vpop.f32.mrf.mxu0
    %1221 = vdwg.mxu0
    %1222 = vmatprep.subr.mxu0 0.0
    %1223 = vmatpush1.xpose.msra.mxu0 0.0
    %1224 = vmatprep.subr.mxu0 0.0
    %1225 = vmatpush1.xpose.msra.mxu0 0.0
    %1226 = vmatprep.subr.mxu0 0.0
    %1227 = vmatpush1.xpose.msra.mxu0 0.0
    %1228 = vmatprep.subr.mxu0 0.0
    %1229 = vmatpush1.xpose.msra.mxu0 0.0
    %1230 = vmatprep.subr.mxu0 0.0
    %1231 = vmatpush1.xpose.msra.mxu0 0.0
    %1232 = vmatprep.subr.mxu0 0.0
    %1233 = vmatpush1.xpose.msra.mxu0 0.0
    %1234 = vmatprep.subr.mxu0 0.0
    %1235 = vmatpush1.xpose.msra.mxu0 0.0
    %1236 = vmatprep.subr.mxu0 0.0
    %1237 = vmatpush1.xpose.msra.mxu0 0.0
    %1238 = vmatprep.subr.mxu0 0.0
    %1239 = vmatpush1.xpose.msra.mxu0 %v764
    %1240 = vmatprep.subr.mxu0 0.0
    %1241 = vmatpush1.xpose.msra.mxu0 %v759
    %1242 = vmatprep.subr.mxu0 0.0
    %1243 = vmatpush1.xpose.msra.mxu0 %v754
    %1244 = vmatprep.subr.mxu0 0.0
    %1245 = vmatpush1.xpose.msra.mxu0 %v749
    %1246 = vmatprep.subr.mxu0 0.0
    %1247 = vmatpush1.xpose.msra.mxu0 %v744
    %1248 = vmatprep.subr.mxu0 0.0
    %1249 = vmatpush1.xpose.msra.mxu0 %v739
    %1250 = vmatprep.subr.mxu0 0.0
    %1251 = vmatpush1.xpose.msra.mxu0 %v734
    %1252 = vmatprep.subr.mxu0 0.0
    %1253 = vmatpush1.xpose.msra.mxu0 %v729
    %1254 = vmatprep.subr.mxu0 0.0
    %1255 = vmatpush2.xpose.msra.mxu0 0.0
    %1256 = vmatprep.subr.mxu0 0.0
    %1257 = vmatpush2.xpose.msra.mxu0 0.0
    %1258 = vmatprep.subr.mxu0 0.0
    %1259 = vmatpush2.xpose.msra.mxu0 0.0
    %1260 = vmatprep.subr.mxu0 0.0
    %1261 = vmatpush2.xpose.msra.mxu0 0.0
    %1262 = vmatprep.subr.mxu0 0.0
    %1263 = vmatpush2.xpose.msra.mxu0 0.0
    %1264 = vmatprep.subr.mxu0 0.0
    %1265 = vmatpush2.xpose.msra.mxu0 0.0
    %1266 = vmatprep.subr.mxu0 0.0
    %1267 = vmatpush2.xpose.msra.mxu0 0.0
    %1268 = vmatprep.subr.mxu0 0.0
    %1269 = vmatpush2.xpose.msra.mxu0 0.0
    %1270 = vmatprep.subr.mxu0 0.0
    %1271 = vmatpush2.xpose.msra.mxu0 0.0
    %1272 = vmatprep.subr.mxu0 0.0
    %1273 = vmatpush2.xpose.msra.mxu0 0.0
    %1274 = vmatprep.subr.mxu0 0.0
    %1275 = vmatpush2.xpose.msra.mxu0 0.0
    %1276 = vmatprep.subr.mxu0 0.0
    %1277 = vmatpush2.xpose.msra.mxu0 0.0
    %1278 = vmatprep.subr.mxu0 0.0
    %1279 = vmatpush2.xpose.msra.mxu0 0.0
    %1280 = vmatprep.subr.mxu0 0.0
    %1281 = vmatpush2.xpose.msra.mxu0 0.0
    %1282 = vmatprep.subr.mxu0 0.0
    %1283 = vmatpush2.xpose.msra.mxu0 0.0
    %1284 = vmatprep.subr.mxu0 0.0
    %1285 = vmatpush2.xpose.msra.mxu0 0.0
    %1286 = vmatprep.mubr.f32.mxu0 0.0
    %1287 = vmatmul.mubr.f32.gmra.mxu0 %v395
    %v1288 = vpop.f32.mrf.mxu0
    %v1289 = vadd.f32 0.0, %v1288
    %v1290 = vpop.f32.mrf.mxu0
    %1291 = vmatprep.mubr.f32.mxu0 0.0
    %1292 = vmatmul.mubr.f32.gmra.mxu0 %v400
    %v1293 = vpop.f32.mrf.mxu0
    %v1294 = vadd.f32 0.0, %v1293
    %v1295 = vpop.f32.mrf.mxu0
    %1296 = vdwg.mxu0
    %1297 = vmatprep.subr.mxu0 0.0
    %1298 = vmatpush1.xpose.msra.mxu0 0.0
    %1299 = vmatprep.subr.mxu0 0.0
    %1300 = vmatpush1.xpose.msra.mxu0 0.0
    %1301 = vmatprep.subr.mxu0 0.0
    %1302 = vmatpush1.xpose.msra.mxu0 0.0
    %1303 = vmatprep.subr.mxu0 0.0
    %1304 = vmatpush1.xpose.msra.mxu0 0.0
    %1305 = vmatprep.subr.mxu0 0.0
    %1306 = vmatpush1.xpose.msra.mxu0 0.0
    %1307 = vmatprep.subr.mxu0 0.0
    %1308 = vmatpush1.xpose.msra.mxu0 0.0
    %1309 = vmatprep.subr.mxu0 0.0
    %1310 = vmatpush1.xpose.msra.mxu0 0.0
    %1311 = vmatprep.subr.mxu0 0.0
    %1312 = vmatpush1.xpose.msra.mxu0 0.0
    %1313 = vmatprep.subr.mxu0 0.0
    %1314 = vmatpush1.xpose.msra.mxu0 %v804
    %1315 = vmatprep.subr.mxu0 0.0
    %1316 = vmatpush1.xpose.msra.mxu0 %v799
    %1317 = vmatprep.subr.mxu0 0.0
    %1318 = vmatpush1.xpose.msra.mxu0 %v794
    %1319 = vmatprep.subr.mxu0 0.0
    %1320 = vmatpush1.xpose.msra.mxu0 %v789
    %1321 = vmatprep.subr.mxu0 0.0
    %1322 = vmatpush1.xpose.msra.mxu0 %v784
    %1323 = vmatprep.subr.mxu0 0.0
    %1324 = vmatpush1.xpose.msra.mxu0 %v779
    %1325 = vmatprep.subr.mxu0 0.0
    %1326 = vmatpush1.xpose.msra.mxu0 %v774
    %1327 = vmatprep.subr.mxu0 0.0
    %1328 = vmatpush1.xpose.msra.mxu0 %v769
    %1329 = vmatprep.subr.mxu0 0.0
    %1330 = vmatpush2.xpose.msra.mxu0 0.0
    %1331 = vmatprep.subr.mxu0 0.0
    %1332 = vmatpush2.xpose.msra.mxu0 0.0
    %1333 = vmatprep.subr.mxu0 0.0
    %1334 = vmatpush2.xpose.msra.mxu0 0.0
    %1335 = vmatprep.subr.mxu0 0.0
    %1336 = vmatpush2.xpose.msra.mxu0 0.0
    %1337 = vmatprep.subr.mxu0 0.0
    %1338 = vmatpush2.xpose.msra.mxu0 0.0
    %1339 = vmatprep.subr.mxu0 0.0
    %1340 = vmatpush2.xpose.msra.mxu0 0.0
    %1341 = vmatprep.subr.mxu0 0.0
    %1342 = vmatpush2.xpose.msra.mxu0 0.0
    %1343 = vmatprep.subr.mxu0 0.0
    %1344 = vmatpush2.xpose.msra.mxu0 0.0
    %1345 = vmatprep.subr.mxu0 0.0
    %1346 = vmatpush2.xpose.msra.mxu0 0.0
    %1347 = vmatprep.subr.mxu0 0.0
    %1348 = vmatpush2.xpose.msra.mxu0 0.0
    %1349 = vmatprep.subr.mxu0 0.0
    %1350 = vmatpush2.xpose.msra.mxu0 0.0
    %1351 = vmatprep.subr.mxu0 0.0
    %1352 = vmatpush2.xpose.msra.mxu0 0.0
    %1353 = vmatprep.subr.mxu0 0.0
    %1354 = vmatpush2.xpose.msra.mxu0 0.0
    %1355 = vmatprep.subr.mxu0 0.0
    %1356 = vmatpush2.xpose.msra.mxu0 0.0
    %1357 = vmatprep.subr.mxu0 0.0
    %1358 = vmatpush2.xpose.msra.mxu0 0.0
    %1359 = vmatprep.subr.mxu0 0.0
    %1360 = vmatpush2.xpose.msra.mxu0 0.0
    %1361 = vmatprep.mubr.f32.mxu0 0.0
    %1362 = vmatmul.mubr.f32.gmra.mxu0 %v405
    %v1363 = vpop.f32.mrf.mxu0
    %v1364 = vadd.f32 0.0, %v1363
    %v1365 = vpop.f32.mrf.mxu0
    %1366 = vmatprep.mubr.f32.mxu0 0.0
    %1367 = vmatmul.mubr.f32.gmra.mxu0 %v410
    %v1368 = vpop.f32.mrf.mxu0
    %v1369 = vadd.f32 0.0, %v1368
    %v1370 = vpop.f32.mrf.mxu0
    %1371 = vdwg.mxu0
    %1372 = vmatprep.subr.mxu0 0.0
    %1373 = vmatpush1.xpose.msra.mxu0 0.0
    %1374 = vmatprep.subr.mxu0 0.0
    %1375 = vmatpush1.xpose.msra.mxu0 0.0
    %1376 = vmatprep.subr.mxu0 0.0
    %1377 = vmatpush1.xpose.msra.mxu0 0.0
    %1378 = vmatprep.subr.mxu0 0.0
    %1379 = vmatpush1.xpose.msra.mxu0 0.0
    %1380 = vmatprep.subr.mxu0 0.0
    %1381 = vmatpush1.xpose.msra.mxu0 0.0
    %1382 = vmatprep.subr.mxu0 0.0
    %1383 = vmatpush1.xpose.msra.mxu0 0.0
    %1384 = vmatprep.subr.mxu0 0.0
    %1385 = vmatpush1.xpose.msra.mxu0 0.0
    %1386 = vmatprep.subr.mxu0 0.0
    %1387 = vmatpush1.xpose.msra.mxu0 0.0
    %1388 = vmatprep.subr.mxu0 0.0
    %1389 = vmatpush1.xpose.msra.mxu0 %v844
    %1390 = vmatprep.subr.mxu0 0.0
    %1391 = vmatpush1.xpose.msra.mxu0 %v839
    %1392 = vmatprep.subr.mxu0 0.0
    %1393 = vmatpush1.xpose.msra.mxu0 %v834
    %1394 = vmatprep.subr.mxu0 0.0
    %1395 = vmatpush1.xpose.msra.mxu0 %v829
    %1396 = vmatprep.subr.mxu0 0.0
    %1397 = vmatpush1.xpose.msra.mxu0 %v824
    %1398 = vmatprep.subr.mxu0 0.0
    %1399 = vmatpush1.xpose.msra.mxu0 %v819
    %1400 = vmatprep.subr.mxu0 0.0
    %1401 = vmatpush1.xpose.msra.mxu0 %v814
    %1402 = vmatprep.subr.mxu0 0.0
    %1403 = vmatpush1.xpose.msra.mxu0 %v809
    %1404 = vmatprep.subr.mxu0 0.0
    %1405 = vmatpush2.xpose.msra.mxu0 0.0
    %1406 = vmatprep.subr.mxu0 0.0
    %1407 = vmatpush2.xpose.msra.mxu0 0.0
    %1408 = vmatprep.subr.mxu0 0.0
    %1409 = vmatpush2.xpose.msra.mxu0 0.0
    %1410 = vmatprep.subr.mxu0 0.0
    %1411 = vmatpush2.xpose.msra.mxu0 0.0
    %1412 = vmatprep.subr.mxu0 0.0
    %1413 = vmatpush2.xpose.msra.mxu0 0.0
    %1414 = vmatprep.subr.mxu0 0.0
    %1415 = vmatpush2.xpose.msra.mxu0 0.0
    %1416 = vmatprep.subr.mxu0 0.0
    %1417 = vmatpush2.xpose.msra.mxu0 0.0
    %1418 = vmatprep.subr.mxu0 0.0
    %1419 = vmatpush2.xpose.msra.mxu0 0.0
    %1420 = vmatprep.subr.mxu0 0.0
    %1421 = vmatpush2.xpose.msra.mxu0 0.0
    %1422 = vmatprep.subr.mxu0 0.0
    %1423 = vmatpush2.xpose.msra.mxu0 0.0
    %1424 = vmatprep.subr.mxu0 0.0
    %1425 = vmatpush2.xpose.msra.mxu0 0.0
    %1426 = vmatprep.subr.mxu0 0.0
    %1427 = vmatpush2.xpose.msra.mxu0 0.0
    %1428 = vmatprep.subr.mxu0 0.0
    %1429 = vmatpush2.xpose.msra.mxu0 0.0
    %1430 = vmatprep.subr.mxu0 0.0
    %1431 = vmatpush2.xpose.msra.mxu0 0.0
    %1432 = vmatprep.subr.mxu0 0.0
    %1433 = vmatpush2.xpose.msra.mxu0 0.0
    %1434 = vmatprep.subr.mxu0 0.0
    %1435 = vmatpush2.xpose.msra.mxu0 0.0
    %1436 = vmatprep.mubr.f32.mxu0 0.0
    %1437 = vmatmul.mubr.f32.gmra.mxu0 %v415
    %v1438 = vpop.f32.mrf.mxu0
    %v1439 = vadd.f32 0.0, %v1438
    %v1440 = vpop.f32.mrf.mxu0
    %1441 = vmatprep.mubr.f32.mxu0 0.0
    %1442 = vmatmul.mubr.f32.gmra.mxu0 %v420
    %v1443 = vpop.f32.mrf.mxu0
    %v1444 = vadd.f32 0.0, %v1443
    %v1445 = vpop.f32.mrf.mxu0
    %1446 = vdwg.mxu0
    %v1447 = vmul.f32 %v914, 0.088388346
    %v1448 = vmul.f32 %v919, 0.088388346
    %v1449 = vmul.f32 %v989, 0.088388346
    %v1450 = vmul.f32 %v994, 0.088388346
    %v1451 = vmul.f32 %v1064, 0.088388346
    %v1452 = vmul.f32 %v1069, 0.088388346
    %v1453 = vmul.f32 %v1139, 0.088388346
    %v1454 = vmul.f32 %v1144, 0.088388346
    %v1455 = vmul.f32 %v1214, 0.088388346
    %v1456 = vmul.f32 %v1219, 0.088388346
    %v1457 = vmul.f32 %v1289, 0.088388346
    %v1458 = vmul.f32 %v1294, 0.088388346
    %v1459 = vmul.f32 %v1364, 0.088388346
    %v1460 = vmul.f32 %v1369, 0.088388346
    %v1461 = vmul.f32 %v1439, 0.088388346
    %v1462 = vmul.f32 %v1444, 0.088388346
    %vm1463 = vcmask 523264
    %v1464 = vsel %vm1463, %v1447, -inf
    %1465 = vmax.xlane.f32.xlu0 %v1464
    %v1466 = vpop.xlane.xlu0 %1465
    %v1467 = vsel %vm1463, %v1448, -inf
    %1468 = vmax.xlane.f32.xlu0 %v1467
    %v1469 = vpop.xlane.xlu0 %1468
    %v1470 = vsel %vm1463, %v1449, -inf
    %1471 = vmax.xlane.f32.xlu0 %v1470
    %v1472 = vpop.xlane.xlu0 %1471
    %v1473 = vsel %vm1463, %v1450, -inf
    %1474 = vmax.xlane.f32.xlu0 %v1473
    %v1475 = vpop.xlane.xlu0 %1474
    %v1476 = vsel %vm1463, %v1451, -inf
    %1477 = vmax.xlane.f32.xlu0 %v1476
    %v1478 = vpop.xlane.xlu0 %1477
    %v1479 = vsel %vm1463, %v1452, -inf
    %1480 = vmax.xlane.f32.xlu0 %v1479
    %v1481 = vpop.xlane.xlu0 %1480
    %v1482 = vsel %vm1463, %v1453, -inf
    %1483 = vmax.xlane.f32.xlu0 %v1482
    %v1484 = vpop.xlane.xlu0 %1483
    %v1485 = vsel %vm1463, %v1454, -inf
    %1486 = vmax.xlane.f32.xlu0 %v1485
    %v1487 = vpop.xlane.xlu0 %1486
    %v1488 = vsel %vm1463, %v1455, -inf
    %1489 = vmax.xlane.f32.xlu0 %v1488
    %v1490 = vpop.xlane.xlu0 %1489
    %v1491 = vsel %vm1463, %v1456, -inf
    %1492 = vmax.xlane.f32.xlu0 %v1491
    %v1493 = vpop.xlane.xlu0 %1492
    %v1494 = vsel %vm1463, %v1457, -inf
    %1495 = vmax.xlane.f32.xlu0 %v1494
    %v1496 = vpop.xlane.xlu0 %1495
    %v1497 = vsel %vm1463, %v1458, -inf
    %1498 = vmax.xlane.f32.xlu0 %v1497
    %v1499 = vpop.xlane.xlu0 %1498
    %v1500 = vsel %vm1463, %v1459, -inf
    %1501 = vmax.xlane.f32.xlu0 %v1500
    %v1502 = vpop.xlane.xlu0 %1501
    %v1503 = vsel %vm1463, %v1460, -inf
    %1504 = vmax.xlane.f32.xlu0 %v1503
    %v1505 = vpop.xlane.xlu0 %1504
    %v1506 = vsel %vm1463, %v1461, -inf
    %1507 = vmax.xlane.f32.xlu0 %v1506
    %v1508 = vpop.xlane.xlu0 %1507
    %v1509 = vsel %vm1463, %v1462, -inf
    %1510 = vmax.xlane.f32.xlu0 %v1509
    %v1511 = vpop.xlane.xlu0 %1510
    %v1512 = vsub.f32 %v1447, %v1466
    %v1513 = vsub.f32 %v1448, %v1469
    %v1514 = vsub.f32 %v1449, %v1472
    %v1515 = vsub.f32 %v1450, %v1475
    %v1516 = vsub.f32 %v1451, %v1478
    %v1517 = vsub.f32 %v1452, %v1481
    %v1518 = vsub.f32 %v1453, %v1484
    %v1519 = vsub.f32 %v1454, %v1487
    %v1520 = vsub.f32 %v1455, %v1490
    %v1521 = vsub.f32 %v1456, %v1493
    %v1522 = vsub.f32 %v1457, %v1496
    %v1523 = vsub.f32 %v1458, %v1499
    %v1524 = vsub.f32 %v1459, %v1502
    %v1525 = vsub.f32 %v1460, %v1505
    %v1526 = vsub.f32 %v1461, %v1508
    %v1527 = vsub.f32 %v1462, %v1511
    %v1528 = vmul.f32 %v1512, 1.442695
    %v1529 = vpow.pop %v1528
    %v1530 = vmul.f32 %v1513, 1.442695
    %v1531 = vpow.pop %v1530
    %v1532 = vmul.f32 %v1514, 1.442695
    %v1533 = vpow.pop %v1532
    %v1534 = vmul.f32 %v1515, 1.442695
    %v1535 = vpow.pop %v1534
    %v1536 = vmul.f32 %v1516, 1.442695
    %v1537 = vpow.pop %v1536
    %v1538 = vmul.f32 %v1517, 1.442695
    %v1539 = vpow.pop %v1538
    %v1540 = vmul.f32 %v1518, 1.442695
    %v1541 = vpow.pop %v1540
    %v1542 = vmul.f32 %v1519, 1.442695
    %v1543 = vpow.pop %v1542
    %v1544 = vmul.f32 %v1520, 1.442695
    %v1545 = vpow.pop %v1544
    %v1546 = vmul.f32 %v1521, 1.442695
    %v1547 = vpow.pop %v1546
    %v1548 = vmul.f32 %v1522, 1.442695
    %v1549 = vpow.pop %v1548
    %v1550 = vmul.f32 %v1523, 1.442695
    %v1551 = vpow.pop %v1550
    %v1552 = vmul.f32 %v1524, 1.442695
    %v1553 = vpow.pop %v1552
    %v1554 = vmul.f32 %v1525, 1.442695
    %v1555 = vpow.pop %v1554
    %v1556 = vmul.f32 %v1526, 1.442695
    %v1557 = vpow.pop %v1556
    %v1558 = vmul.f32 %v1527, 1.442695
    %v1559 = vpow.pop %v1558
    %v1560 = vsel %vm1463, %v1529, 0.0
    %1561 = vadd.xlane.f32.xlu0 %v1560
    %v1562 = vpop.xlane.xlu0 %1561
    %v1563 = vsel %vm1463, %v1531, 0.0
    %1564 = vadd.xlane.f32.xlu0 %v1563
    %v1565 = vpop.xlane.xlu0 %1564
    %v1566 = vsel %vm1463, %v1533, 0.0
    %1567 = vadd.xlane.f32.xlu0 %v1566
    %v1568 = vpop.xlane.xlu0 %1567
    %v1569 = vsel %vm1463, %v1535, 0.0
    %1570 = vadd.xlane.f32.xlu0 %v1569
    %v1571 = vpop.xlane.xlu0 %1570
    %v1572 = vsel %vm1463, %v1537, 0.0
    %1573 = vadd.xlane.f32.xlu0 %v1572
    %v1574 = vpop.xlane.xlu0 %1573
    %v1575 = vsel %vm1463, %v1539, 0.0
    %1576 = vadd.xlane.f32.xlu0 %v1575
    %v1577 = vpop.xlane.xlu0 %1576
    %v1578 = vsel %vm1463, %v1541, 0.0
    %1579 = vadd.xlane.f32.xlu0 %v1578
    %v1580 = vpop.xlane.xlu0 %1579
    %v1581 = vsel %vm1463, %v1543, 0.0
    %1582 = vadd.xlane.f32.xlu0 %v1581
    %v1583 = vpop.xlane.xlu0 %1582
    %v1584 = vsel %vm1463, %v1545, 0.0
    %1585 = vadd.xlane.f32.xlu0 %v1584
    %v1586 = vpop.xlane.xlu0 %1585
    %v1587 = vsel %vm1463, %v1547, 0.0
    %1588 = vadd.xlane.f32.xlu0 %v1587
    %v1589 = vpop.xlane.xlu0 %1588
    %v1590 = vsel %vm1463, %v1549, 0.0
    %1591 = vadd.xlane.f32.xlu0 %v1590
    %v1592 = vpop.xlane.xlu0 %1591
    %v1593 = vsel %vm1463, %v1551, 0.0
    %1594 = vadd.xlane.f32.xlu0 %v1593
    %v1595 = vpop.xlane.xlu0 %1594
    %v1596 = vsel %vm1463, %v1553, 0.0
    %1597 = vadd.xlane.f32.xlu0 %v1596
    %v1598 = vpop.xlane.xlu0 %1597
    %v1599 = vsel %vm1463, %v1555, 0.0
    %1600 = vadd.xlane.f32.xlu0 %v1599
    %v1601 = vpop.xlane.xlu0 %1600
    %v1602 = vsel %vm1463, %v1557, 0.0
    %1603 = vadd.xlane.f32.xlu0 %v1602
    %v1604 = vpop.xlane.xlu0 %1603
    %v1605 = vsel %vm1463, %v1559, 0.0
    %1606 = vadd.xlane.f32.xlu0 %v1605
    %v1607 = vpop.xlane.xlu0 %1606
    %v1608 = vrcp.pop %v1562
    %v1609 = vrcp.pop %v1565
    %v1610 = vrcp.pop %v1568
    %v1611 = vrcp.pop %v1571
    %v1612 = vrcp.pop %v1574
    %v1613 = vrcp.pop %v1577
    %v1614 = vrcp.pop %v1580
    %v1615 = vrcp.pop %v1583
    %v1616 = vrcp.pop %v1586
    %v1617 = vrcp.pop %v1589
    %v1618 = vrcp.pop %v1592
    %v1619 = vrcp.pop %v1595
    %v1620 = vrcp.pop %v1598
    %v1621 = vrcp.pop %v1601
    %v1622 = vrcp.pop %v1604
    %v1623 = vrcp.pop %v1607
    %v1624 = vmul.f32 %v1529, %v1608
    %v1625 = vmul.f32 %v1531, %v1609
    %v1626 = vmul.f32 %v1533, %v1610
    %v1627 = vmul.f32 %v1535, %v1611
    %v1628 = vmul.f32 %v1537, %v1612
    %v1629 = vmul.f32 %v1539, %v1613
    %v1630 = vmul.f32 %v1541, %v1614
    %v1631 = vmul.f32 %v1543, %v1615
    %v1632 = vmul.f32 %v1545, %v1616
    %v1633 = vmul.f32 %v1547, %v1617
    %v1634 = vmul.f32 %v1549, %v1618
    %v1635 = vmul.f32 %v1551, %v1619
    %v1636 = vmul.f32 %v1553, %v1620
    %v1637 = vmul.f32 %v1555, %v1621
    %v1638 = vmul.f32 %v1557, %v1622
    %v1639 = vmul.f32 %v1559, %v1623
    %v1641 = vsel %vm1463, %v1624, 0
    %v1644 = vsel %vm1463, %v1625, 0
    %1646 = vmatprep.subr.mxu0 0.0
    %1647 = vmatpush1.msra.mxu0 0.0
    %1648 = vmatprep.subr.mxu0 0.0
    %1649 = vmatpush1.msra.mxu0 0.0
    %1650 = vmatprep.subr.mxu0 0.0
    %1651 = vmatpush1.msra.mxu0 0.0
    %1652 = vmatprep.subr.mxu0 0.0
    %1653 = vmatpush1.msra.mxu0 0.0
    %1654 = vmatprep.subr.mxu0 0.0
    %1655 = vmatpush1.msra.mxu0 0.0
    %1656 = vmatprep.subr.mxu0 0.0
    %1657 = vmatpush1.msra.mxu0 0.0
    %1658 = vmatprep.subr.mxu0 0.0
    %1659 = vmatpush1.msra.mxu0 0.0
    %1660 = vmatprep.subr.mxu0 0.0
    %1661 = vmatpush1.msra.mxu0 0.0
    %1662 = vmatprep.subr.mxu0 %v126
    %1663 = vmatpush1.msra.mxu0 %v125
    %1664 = vmatprep.subr.mxu0 %v124
    %1665 = vmatpush1.msra.mxu0 %v123
    %1666 = vmatprep.subr.mxu0 %v122
    %1667 = vmatpush1.msra.mxu0 %v121
    %1668 = vmatprep.subr.mxu0 %v120
    %1669 = vmatpush1.msra.mxu0 %v119
    %1670 = vmatprep.subr.mxu0 %v118
    %1671 = vmatpush1.msra.mxu0 %v117
    %1672 = vmatprep.subr.mxu0 %v116
    %1673 = vmatpush1.msra.mxu0 %v115
    %1674 = vmatprep.subr.mxu0 %v114
    %1675 = vmatpush1.msra.mxu0 %v113
    %1676 = vmatprep.subr.mxu0 %v112
    %1677 = vmatpush1.msra.mxu0 %v111
    %1678 = vmatprep.subr.mxu0 0.0
    %1679 = vmatpush2.msra.mxu0 0.0
    %1680 = vmatprep.subr.mxu0 0.0
    %1681 = vmatpush2.msra.mxu0 0.0
    %1682 = vmatprep.subr.mxu0 0.0
    %1683 = vmatpush2.msra.mxu0 0.0
    %1684 = vmatprep.subr.mxu0 0.0
    %1685 = vmatpush2.msra.mxu0 0.0
    %1686 = vmatprep.subr.mxu0 0.0
    %1687 = vmatpush2.msra.mxu0 0.0
    %1688 = vmatprep.subr.mxu0 0.0
    %1689 = vmatpush2.msra.mxu0 0.0
    %1690 = vmatprep.subr.mxu0 0.0
    %1691 = vmatpush2.msra.mxu0 0.0
    %1692 = vmatprep.subr.mxu0 0.0
    %1693 = vmatpush2.msra.mxu0 0.0
    %1694 = vmatprep.subr.mxu0 0.0
    %1695 = vmatpush2.msra.mxu0 0.0
    %1696 = vmatprep.subr.mxu0 0.0
    %1697 = vmatpush2.msra.mxu0 0.0
    %1698 = vmatprep.subr.mxu0 0.0
    %1699 = vmatpush2.msra.mxu0 0.0
    %1700 = vmatprep.subr.mxu0 0.0
    %1701 = vmatpush2.msra.mxu0 0.0
    %1702 = vmatprep.subr.mxu0 0.0
    %1703 = vmatpush2.msra.mxu0 0.0
    %1704 = vmatprep.subr.mxu0 0.0
    %1705 = vmatpush2.msra.mxu0 0.0
    %1706 = vmatprep.subr.mxu0 0.0
    %1707 = vmatpush2.msra.mxu0 0.0
    %1708 = vmatprep.subr.mxu0 0.0
    %1709 = vmatpush2.msra.mxu0 0.0
    %1710 = vmatprep.mubr.f32.mxu0 0.0
    %1711 = vmatmul.mubr.f32.gmra.mxu0 %v1641
    %v1712 = vpop.f32.mrf.mxu0
    %v1713 = vadd.f32 0.0, %v1712
    %v1714 = vpop.f32.mrf.mxu0
    %v1715 = vadd.f32 0.0, %v1714
    %1716 = vmatprep.mubr.f32.mxu0 0.0
    %1717 = vmatmul.mubr.f32.gmra.mxu0 %v1644
    %v1718 = vpop.f32.mrf.mxu0
    %v1719 = vadd.f32 0.0, %v1718
    %v1720 = vpop.f32.mrf.mxu0
    %v1721 = vadd.f32 0.0, %v1720
    %1722 = vdwg.mxu0
    %v1724 = vsel %vm1463, %v1626, 0
    %v1727 = vsel %vm1463, %v1627, 0
    %1729 = vmatprep.subr.mxu0 0.0
    %1730 = vmatpush1.msra.mxu0 0.0
    %1731 = vmatprep.subr.mxu0 0.0
    %1732 = vmatpush1.msra.mxu0 0.0
    %1733 = vmatprep.subr.mxu0 0.0
    %1734 = vmatpush1.msra.mxu0 0.0
    %1735 = vmatprep.subr.mxu0 0.0
    %1736 = vmatpush1.msra.mxu0 0.0
    %1737 = vmatprep.subr.mxu0 0.0
    %1738 = vmatpush1.msra.mxu0 0.0
    %1739 = vmatprep.subr.mxu0 0.0
    %1740 = vmatpush1.msra.mxu0 0.0
    %1741 = vmatprep.subr.mxu0 0.0
    %1742 = vmatpush1.msra.mxu0 0.0
    %1743 = vmatprep.subr.mxu0 0.0
    %1744 = vmatpush1.msra.mxu0 0.0
    %1745 = vmatprep.subr.mxu0 %v142
    %1746 = vmatpush1.msra.mxu0 %v141
    %1747 = vmatprep.subr.mxu0 %v140
    %1748 = vmatpush1.msra.mxu0 %v139
    %1749 = vmatprep.subr.mxu0 %v138
    %1750 = vmatpush1.msra.mxu0 %v137
    %1751 = vmatprep.subr.mxu0 %v136
    %1752 = vmatpush1.msra.mxu0 %v135
    %1753 = vmatprep.subr.mxu0 %v134
    %1754 = vmatpush1.msra.mxu0 %v133
    %1755 = vmatprep.subr.mxu0 %v132
    %1756 = vmatpush1.msra.mxu0 %v131
    %1757 = vmatprep.subr.mxu0 %v130
    %1758 = vmatpush1.msra.mxu0 %v129
    %1759 = vmatprep.subr.mxu0 %v128
    %1760 = vmatpush1.msra.mxu0 %v127
    %1761 = vmatprep.subr.mxu0 0.0
    %1762 = vmatpush2.msra.mxu0 0.0
    %1763 = vmatprep.subr.mxu0 0.0
    %1764 = vmatpush2.msra.mxu0 0.0
    %1765 = vmatprep.subr.mxu0 0.0
    %1766 = vmatpush2.msra.mxu0 0.0
    %1767 = vmatprep.subr.mxu0 0.0
    %1768 = vmatpush2.msra.mxu0 0.0
    %1769 = vmatprep.subr.mxu0 0.0
    %1770 = vmatpush2.msra.mxu0 0.0
    %1771 = vmatprep.subr.mxu0 0.0
    %1772 = vmatpush2.msra.mxu0 0.0
    %1773 = vmatprep.subr.mxu0 0.0
    %1774 = vmatpush2.msra.mxu0 0.0
    %1775 = vmatprep.subr.mxu0 0.0
    %1776 = vmatpush2.msra.mxu0 0.0
    %1777 = vmatprep.subr.mxu0 0.0
    %1778 = vmatpush2.msra.mxu0 0.0
    %1779 = vmatprep.subr.mxu0 0.0
    %1780 = vmatpush2.msra.mxu0 0.0
    %1781 = vmatprep.subr.mxu0 0.0
    %1782 = vmatpush2.msra.mxu0 0.0
    %1783 = vmatprep.subr.mxu0 0.0
    %1784 = vmatpush2.msra.mxu0 0.0
    %1785 = vmatprep.subr.mxu0 0.0
    %1786 = vmatpush2.msra.mxu0 0.0
    %1787 = vmatprep.subr.mxu0 0.0
    %1788 = vmatpush2.msra.mxu0 0.0
    %1789 = vmatprep.subr.mxu0 0.0
    %1790 = vmatpush2.msra.mxu0 0.0
    %1791 = vmatprep.subr.mxu0 0.0
    %1792 = vmatpush2.msra.mxu0 0.0
    %1793 = vmatprep.mubr.f32.mxu0 0.0
    %1794 = vmatmul.mubr.f32.gmra.mxu0 %v1724
    %v1795 = vpop.f32.mrf.mxu0
    %v1796 = vadd.f32 0.0, %v1795
    %v1797 = vpop.f32.mrf.mxu0
    %v1798 = vadd.f32 0.0, %v1797
    %1799 = vmatprep.mubr.f32.mxu0 0.0
    %1800 = vmatmul.mubr.f32.gmra.mxu0 %v1727
    %v1801 = vpop.f32.mrf.mxu0
    %v1802 = vadd.f32 0.0, %v1801
    %v1803 = vpop.f32.mrf.mxu0
    %v1804 = vadd.f32 0.0, %v1803
    %1805 = vdwg.mxu0
    %v1807 = vsel %vm1463, %v1628, 0
    %v1810 = vsel %vm1463, %v1629, 0
    %1812 = vmatprep.subr.mxu0 0.0
    %1813 = vmatpush1.msra.mxu0 0.0
    %1814 = vmatprep.subr.mxu0 0.0
    %1815 = vmatpush1.msra.mxu0 0.0
    %1816 = vmatprep.subr.mxu0 0.0
    %1817 = vmatpush1.msra.mxu0 0.0
    %1818 = vmatprep.subr.mxu0 0.0
    %1819 = vmatpush1.msra.mxu0 0.0
    %1820 = vmatprep.subr.mxu0 0.0
    %1821 = vmatpush1.msra.mxu0 0.0
    %1822 = vmatprep.subr.mxu0 0.0
    %1823 = vmatpush1.msra.mxu0 0.0
    %1824 = vmatprep.subr.mxu0 0.0
    %1825 = vmatpush1.msra.mxu0 0.0
    %1826 = vmatprep.subr.mxu0 0.0
    %1827 = vmatpush1.msra.mxu0 0.0
    %1828 = vmatprep.subr.mxu0 %v158
    %1829 = vmatpush1.msra.mxu0 %v157
    %1830 = vmatprep.subr.mxu0 %v156
    %1831 = vmatpush1.msra.mxu0 %v155
    %1832 = vmatprep.subr.mxu0 %v154
    %1833 = vmatpush1.msra.mxu0 %v153
    %1834 = vmatprep.subr.mxu0 %v152
    %1835 = vmatpush1.msra.mxu0 %v151
    %1836 = vmatprep.subr.mxu0 %v150
    %1837 = vmatpush1.msra.mxu0 %v149
    %1838 = vmatprep.subr.mxu0 %v148
    %1839 = vmatpush1.msra.mxu0 %v147
    %1840 = vmatprep.subr.mxu0 %v146
    %1841 = vmatpush1.msra.mxu0 %v145
    %1842 = vmatprep.subr.mxu0 %v144
    %1843 = vmatpush1.msra.mxu0 %v143
    %1844 = vmatprep.subr.mxu0 0.0
    %1845 = vmatpush2.msra.mxu0 0.0
    %1846 = vmatprep.subr.mxu0 0.0
    %1847 = vmatpush2.msra.mxu0 0.0
    %1848 = vmatprep.subr.mxu0 0.0
    %1849 = vmatpush2.msra.mxu0 0.0
    %1850 = vmatprep.subr.mxu0 0.0
    %1851 = vmatpush2.msra.mxu0 0.0
    %1852 = vmatprep.subr.mxu0 0.0
    %1853 = vmatpush2.msra.mxu0 0.0
    %1854 = vmatprep.subr.mxu0 0.0
    %1855 = vmatpush2.msra.mxu0 0.0
    %1856 = vmatprep.subr.mxu0 0.0
    %1857 = vmatpush2.msra.mxu0 0.0
    %1858 = vmatprep.subr.mxu0 0.0
    %1859 = vmatpush2.msra.mxu0 0.0
    %1860 = vmatprep.subr.mxu0 0.0
    %1861 = vmatpush2.msra.mxu0 0.0
    %1862 = vmatprep.subr.mxu0 0.0
    %1863 = vmatpush2.msra.mxu0 0.0
    %1864 = vmatprep.subr.mxu0 0.0
    %1865 = vmatpush2.msra.mxu0 0.0
    %1866 = vmatprep.subr.mxu0 0.0
    %1867 = vmatpush2.msra.mxu0 0.0
    %1868 = vmatprep.subr.mxu0 0.0
    %1869 = vmatpush2.msra.mxu0 0.0
    %1870 = vmatprep.subr.mxu0 0.0
    %1871 = vmatpush2.msra.mxu0 0.0
    %1872 = vmatprep.subr.mxu0 0.0
    %1873 = vmatpush2.msra.mxu0 0.0
    %1874 = vmatprep.subr.mxu0 0.0
    %1875 = vmatpush2.msra.mxu0 0.0
    %1876 = vmatprep.mubr.f32.mxu0 0.0
    %1877 = vmatmul.mubr.f32.gmra.mxu0 %v1807
    %v1878 = vpop.f32.mrf.mxu0
    %v1879 = vadd.f32 0.0, %v1878
    %v1880 = vpop.f32.mrf.mxu0
    %v1881 = vadd.f32 0.0, %v1880
    %1882 = vmatprep.mubr.f32.mxu0 0.0
    %1883 = vmatmul.mubr.f32.gmra.mxu0 %v1810
    %v1884 = vpop.f32.mrf.mxu0
    %v1885 = vadd.f32 0.0, %v1884
    %v1886 = vpop.f32.mrf.mxu0
    %v1887 = vadd.f32 0.0, %v1886
    %1888 = vdwg.mxu0
    %v1890 = vsel %vm1463, %v1630, 0
    %v1893 = vsel %vm1463, %v1631, 0
    %1895 = vmatprep.subr.mxu0 0.0
    %1896 = vmatpush1.msra.mxu0 0.0
    %1897 = vmatprep.subr.mxu0 0.0
    %1898 = vmatpush1.msra.mxu0 0.0
    %1899 = vmatprep.subr.mxu0 0.0
    %1900 = vmatpush1.msra.mxu0 0.0
    %1901 = vmatprep.subr.mxu0 0.0
    %1902 = vmatpush1.msra.mxu0 0.0
    %1903 = vmatprep.subr.mxu0 0.0
    %1904 = vmatpush1.msra.mxu0 0.0
    %1905 = vmatprep.subr.mxu0 0.0
    %1906 = vmatpush1.msra.mxu0 0.0
    %1907 = vmatprep.subr.mxu0 0.0
    %1908 = vmatpush1.msra.mxu0 0.0
    %1909 = vmatprep.subr.mxu0 0.0
    %1910 = vmatpush1.msra.mxu0 0.0
    %1911 = vmatprep.subr.mxu0 %v174
    %1912 = vmatpush1.msra.mxu0 %v173
    %1913 = vmatprep.subr.mxu0 %v172
    %1914 = vmatpush1.msra.mxu0 %v171
    %1915 = vmatprep.subr.mxu0 %v170
    %1916 = vmatpush1.msra.mxu0 %v169
    %1917 = vmatprep.subr.mxu0 %v168
    %1918 = vmatpush1.msra.mxu0 %v167
    %1919 = vmatprep.subr.mxu0 %v166
    %1920 = vmatpush1.msra.mxu0 %v165
    %1921 = vmatprep.subr.mxu0 %v164
    %1922 = vmatpush1.msra.mxu0 %v163
    %1923 = vmatprep.subr.mxu0 %v162
    %1924 = vmatpush1.msra.mxu0 %v161
    %1925 = vmatprep.subr.mxu0 %v160
    %1926 = vmatpush1.msra.mxu0 %v159
    %1927 = vmatprep.subr.mxu0 0.0
    %1928 = vmatpush2.msra.mxu0 0.0
    %1929 = vmatprep.subr.mxu0 0.0
    %1930 = vmatpush2.msra.mxu0 0.0
    %1931 = vmatprep.subr.mxu0 0.0
    %1932 = vmatpush2.msra.mxu0 0.0
    %1933 = vmatprep.subr.mxu0 0.0
    %1934 = vmatpush2.msra.mxu0 0.0
    %1935 = vmatprep.subr.mxu0 0.0
    %1936 = vmatpush2.msra.mxu0 0.0
    %1937 = vmatprep.subr.mxu0 0.0
    %1938 = vmatpush2.msra.mxu0 0.0
    %1939 = vmatprep.subr.mxu0 0.0
    %1940 = vmatpush2.msra.mxu0 0.0
    %1941 = vmatprep.subr.mxu0 0.0
    %1942 = vmatpush2.msra.mxu0 0.0
    %1943 = vmatprep.subr.mxu0 0.0
    %1944 = vmatpush2.msra.mxu0 0.0
    %1945 = vmatprep.subr.mxu0 0.0
    %1946 = vmatpush2.msra.mxu0 0.0
    %1947 = vmatprep.subr.mxu0 0.0
    %1948 = vmatpush2.msra.mxu0 0.0
    %1949 = vmatprep.subr.mxu0 0.0
    %1950 = vmatpush2.msra.mxu0 0.0
    %1951 = vmatprep.subr.mxu0 0.0
    %1952 = vmatpush2.msra.mxu0 0.0
    %1953 = vmatprep.subr.mxu0 0.0
    %1954 = vmatpush2.msra.mxu0 0.0
    %1955 = vmatprep.subr.mxu0 0.0
    %1956 = vmatpush2.msra.mxu0 0.0
    %1957 = vmatprep.subr.mxu0 0.0
    %1958 = vmatpush2.msra.mxu0 0.0
    %1959 = vmatprep.mubr.f32.mxu0 0.0
    %1960 = vmatmul.mubr.f32.gmra.mxu0 %v1890
    %v1961 = vpop.f32.mrf.mxu0
    %v1962 = vadd.f32 0.0, %v1961
    %v1963 = vpop.f32.mrf.mxu0
    %v1964 = vadd.f32 0.0, %v1963
    %1965 = vmatprep.mubr.f32.mxu0 0.0
    %1966 = vmatmul.mubr.f32.gmra.mxu0 %v1893
    %v1967 = vpop.f32.mrf.mxu0
    %v1968 = vadd.f32 0.0, %v1967
    %v1969 = vpop.f32.mrf.mxu0
    %v1970 = vadd.f32 0.0, %v1969
    %1971 = vdwg.mxu0
    %v1973 = vsel %vm1463, %v1632, 0
    %v1976 = vsel %vm1463, %v1633, 0
    %1978 = vmatprep.subr.mxu0 0.0
    %1979 = vmatpush1.msra.mxu0 0.0
    %1980 = vmatprep.subr.mxu0 0.0
    %1981 = vmatpush1.msra.mxu0 0.0
    %1982 = vmatprep.subr.mxu0 0.0
    %1983 = vmatpush1.msra.mxu0 0.0
    %1984 = vmatprep.subr.mxu0 0.0
    %1985 = vmatpush1.msra.mxu0 0.0
    %1986 = vmatprep.subr.mxu0 0.0
    %1987 = vmatpush1.msra.mxu0 0.0
    %1988 = vmatprep.subr.mxu0 0.0
    %1989 = vmatpush1.msra.mxu0 0.0
    %1990 = vmatprep.subr.mxu0 0.0
    %1991 = vmatpush1.msra.mxu0 0.0
    %1992 = vmatprep.subr.mxu0 0.0
    %1993 = vmatpush1.msra.mxu0 0.0
    %1994 = vmatprep.subr.mxu0 %v190
    %1995 = vmatpush1.msra.mxu0 %v189
    %1996 = vmatprep.subr.mxu0 %v188
    %1997 = vmatpush1.msra.mxu0 %v187
    %1998 = vmatprep.subr.mxu0 %v186
    %1999 = vmatpush1.msra.mxu0 %v185
    %2000 = vmatprep.subr.mxu0 %v184
    %2001 = vmatpush1.msra.mxu0 %v183
    %2002 = vmatprep.subr.mxu0 %v182
    %2003 = vmatpush1.msra.mxu0 %v181
    %2004 = vmatprep.subr.mxu0 %v180
    %2005 = vmatpush1.msra.mxu0 %v179
    %2006 = vmatprep.subr.mxu0 %v178
    %2007 = vmatpush1.msra.mxu0 %v177
    %2008 = vmatprep.subr.mxu0 %v176
    %2009 = vmatpush1.msra.mxu0 %v175
    %2010 = vmatprep.subr.mxu0 0.0
    %2011 = vmatpush2.msra.mxu0 0.0
    %2012 = vmatprep.subr.mxu0 0.0
    %2013 = vmatpush2.msra.mxu0 0.0
    %2014 = vmatprep.subr.mxu0 0.0
    %2015 = vmatpush2.msra.mxu0 0.0
    %2016 = vmatprep.subr.mxu0 0.0
    %2017 = vmatpush2.msra.mxu0 0.0
    %2018 = vmatprep.subr.mxu0 0.0
    %2019 = vmatpush2.msra.mxu0 0.0
    %2020 = vmatprep.subr.mxu0 0.0
    %2021 = vmatpush2.msra.mxu0 0.0
    %2022 = vmatprep.subr.mxu0 0.0
    %2023 = vmatpush2.msra.mxu0 0.0
    %2024 = vmatprep.subr.mxu0 0.0
    %2025 = vmatpush2.msra.mxu0 0.0
    %2026 = vmatprep.subr.mxu0 0.0
    %2027 = vmatpush2.msra.mxu0 0.0
    %2028 = vmatprep.subr.mxu0 0.0
    %2029 = vmatpush2.msra.mxu0 0.0
    %2030 = vmatprep.subr.mxu0 0.0
    %2031 = vmatpush2.msra.mxu0 0.0
    %2032 = vmatprep.subr.mxu0 0.0
    %2033 = vmatpush2.msra.mxu0 0.0
    %2034 = vmatprep.subr.mxu0 0.0
    %2035 = vmatpush2.msra.mxu0 0.0
    %2036 = vmatprep.subr.mxu0 0.0
    %2037 = vmatpush2.msra.mxu0 0.0
    %2038 = vmatprep.subr.mxu0 0.0
    %2039 = vmatpush2.msra.mxu0 0.0
    %2040 = vmatprep.subr.mxu0 0.0
    %2041 = vmatpush2.msra.mxu0 0.0
    %2042 = vmatprep.mubr.f32.mxu0 0.0
    %2043 = vmatmul.mubr.f32.gmra.mxu0 %v1973
    %v2044 = vpop.f32.mrf.mxu0
    %v2045 = vadd.f32 0.0, %v2044
    %v2046 = vpop.f32.mrf.mxu0
    %v2047 = vadd.f32 0.0, %v2046
    %2048 = vmatprep.mubr.f32.mxu0 0.0
    %2049 = vmatmul.mubr.f32.gmra.mxu0 %v1976
    %v2050 = vpop.f32.mrf.mxu0
    %v2051 = vadd.f32 0.0, %v2050
    %v2052 = vpop.f32.mrf.mxu0
    %v2053 = vadd.f32 0.0, %v2052
    %2054 = vdwg.mxu0
    %v2056 = vsel %vm1463, %v1634, 0
    %v2059 = vsel %vm1463, %v1635, 0
    %2061 = vmatprep.subr.mxu0 0.0
    %2062 = vmatpush1.msra.mxu0 0.0
    %2063 = vmatprep.subr.mxu0 0.0
    %2064 = vmatpush1.msra.mxu0 0.0
    %2065 = vmatprep.subr.mxu0 0.0
    %2066 = vmatpush1.msra.mxu0 0.0
    %2067 = vmatprep.subr.mxu0 0.0
    %2068 = vmatpush1.msra.mxu0 0.0
    %2069 = vmatprep.subr.mxu0 0.0
    %2070 = vmatpush1.msra.mxu0 0.0
    %2071 = vmatprep.subr.mxu0 0.0
    %2072 = vmatpush1.msra.mxu0 0.0
    %2073 = vmatprep.subr.mxu0 0.0
    %2074 = vmatpush1.msra.mxu0 0.0
    %2075 = vmatprep.subr.mxu0 0.0
    %2076 = vmatpush1.msra.mxu0 0.0
    %2077 = vmatprep.subr.mxu0 %v206
    %2078 = vmatpush1.msra.mxu0 %v205
    %2079 = vmatprep.subr.mxu0 %v204
    %2080 = vmatpush1.msra.mxu0 %v203
    %2081 = vmatprep.subr.mxu0 %v202
    %2082 = vmatpush1.msra.mxu0 %v201
    %2083 = vmatprep.subr.mxu0 %v200
    %2084 = vmatpush1.msra.mxu0 %v199
    %2085 = vmatprep.subr.mxu0 %v198
    %2086 = vmatpush1.msra.mxu0 %v197
    %2087 = vmatprep.subr.mxu0 %v196
    %2088 = vmatpush1.msra.mxu0 %v195
    %2089 = vmatprep.subr.mxu0 %v194
    %2090 = vmatpush1.msra.mxu0 %v193
    %2091 = vmatprep.subr.mxu0 %v192
    %2092 = vmatpush1.msra.mxu0 %v191
    %2093 = vmatprep.subr.mxu0 0.0
    %2094 = vmatpush2.msra.mxu0 0.0
    %2095 = vmatprep.subr.mxu0 0.0
    %2096 = vmatpush2.msra.mxu0 0.0
    %2097 = vmatprep.subr.mxu0 0.0
    %2098 = vmatpush2.msra.mxu0 0.0
    %2099 = vmatprep.subr.mxu0 0.0
    %2100 = vmatpush2.msra.mxu0 0.0
    %2101 = vmatprep.subr.mxu0 0.0
    %2102 = vmatpush2.msra.mxu0 0.0
    %2103 = vmatprep.subr.mxu0 0.0
    %2104 = vmatpush2.msra.mxu0 0.0
    %2105 = vmatprep.subr.mxu0 0.0
    %2106 = vmatpush2.msra.mxu0 0.0
    %2107 = vmatprep.subr.mxu0 0.0
    %2108 = vmatpush2.msra.mxu0 0.0
    %2109 = vmatprep.subr.mxu0 0.0
    %2110 = vmatpush2.msra.mxu0 0.0
    %2111 = vmatprep.subr.mxu0 0.0
    %2112 = vmatpush2.msra.mxu0 0.0
    %2113 = vmatprep.subr.mxu0 0.0
    %2114 = vmatpush2.msra.mxu0 0.0
    %2115 = vmatprep.subr.mxu0 0.0
    %2116 = vmatpush2.msra.mxu0 0.0
    %2117 = vmatprep.subr.mxu0 0.0
    %2118 = vmatpush2.msra.mxu0 0.0
    %2119 = vmatprep.subr.mxu0 0.0
    %2120 = vmatpush2.msra.mxu0 0.0
    %2121 = vmatprep.subr.mxu0 0.0
    %2122 = vmatpush2.msra.mxu0 0.0
    %2123 = vmatprep.subr.mxu0 0.0
    %2124 = vmatpush2.msra.mxu0 0.0
    %2125 = vmatprep.mubr.f32.mxu0 0.0
    %2126 = vmatmul.mubr.f32.gmra.mxu0 %v2056
    %v2127 = vpop.f32.mrf.mxu0
    %v2128 = vadd.f32 0.0, %v2127
    %v2129 = vpop.f32.mrf.mxu0
    %v2130 = vadd.f32 0.0, %v2129
    %2131 = vmatprep.mubr.f32.mxu0 0.0
    %2132 = vmatmul.mubr.f32.gmra.mxu0 %v2059
    %v2133 = vpop.f32.mrf.mxu0
    %v2134 = vadd.f32 0.0, %v2133
    %v2135 = vpop.f32.mrf.mxu0
    %v2136 = vadd.f32 0.0, %v2135
    %2137 = vdwg.mxu0
    %v2139 = vsel %vm1463, %v1636, 0
    %v2142 = vsel %vm1463, %v1637, 0
    %2144 = vmatprep.subr.mxu0 0.0
    %2145 = vmatpush1.msra.mxu0 0.0
    %2146 = vmatprep.subr.mxu0 0.0
    %2147 = vmatpush1.msra.mxu0 0.0
    %2148 = vmatprep.subr.mxu0 0.0
    %2149 = vmatpush1.msra.mxu0 0.0
    %2150 = vmatprep.subr.mxu0 0.0
    %2151 = vmatpush1.msra.mxu0 0.0
    %2152 = vmatprep.subr.mxu0 0.0
    %2153 = vmatpush1.msra.mxu0 0.0
    %2154 = vmatprep.subr.mxu0 0.0
    %2155 = vmatpush1.msra.mxu0 0.0
    %2156 = vmatprep.subr.mxu0 0.0
    %2157 = vmatpush1.msra.mxu0 0.0
    %2158 = vmatprep.subr.mxu0 0.0
    %2159 = vmatpush1.msra.mxu0 0.0
    %2160 = vmatprep.subr.mxu0 %v222
    %2161 = vmatpush1.msra.mxu0 %v221
    %2162 = vmatprep.subr.mxu0 %v220
    %2163 = vmatpush1.msra.mxu0 %v219
    %2164 = vmatprep.subr.mxu0 %v218
    %2165 = vmatpush1.msra.mxu0 %v217
    %2166 = vmatprep.subr.mxu0 %v216
    %2167 = vmatpush1.msra.mxu0 %v215
    %2168 = vmatprep.subr.mxu0 %v214
    %2169 = vmatpush1.msra.mxu0 %v213
    %2170 = vmatprep.subr.mxu0 %v212
    %2171 = vmatpush1.msra.mxu0 %v211
    %2172 = vmatprep.subr.mxu0 %v210
    %2173 = vmatpush1.msra.mxu0 %v209
    %2174 = vmatprep.subr.mxu0 %v208
    %2175 = vmatpush1.msra.mxu0 %v207
    %2176 = vmatprep.subr.mxu0 0.0
    %2177 = vmatpush2.msra.mxu0 0.0
    %2178 = vmatprep.subr.mxu0 0.0
    %2179 = vmatpush2.msra.mxu0 0.0
    %2180 = vmatprep.subr.mxu0 0.0
    %2181 = vmatpush2.msra.mxu0 0.0
    %2182 = vmatprep.subr.mxu0 0.0
    %2183 = vmatpush2.msra.mxu0 0.0
    %2184 = vmatprep.subr.mxu0 0.0
    %2185 = vmatpush2.msra.mxu0 0.0
    %2186 = vmatprep.subr.mxu0 0.0
    %2187 = vmatpush2.msra.mxu0 0.0
    %2188 = vmatprep.subr.mxu0 0.0
    %2189 = vmatpush2.msra.mxu0 0.0
    %2190 = vmatprep.subr.mxu0 0.0
    %2191 = vmatpush2.msra.mxu0 0.0
    %2192 = vmatprep.subr.mxu0 0.0
    %2193 = vmatpush2.msra.mxu0 0.0
    %2194 = vmatprep.subr.mxu0 0.0
    %2195 = vmatpush2.msra.mxu0 0.0
    %2196 = vmatprep.subr.mxu0 0.0
    %2197 = vmatpush2.msra.mxu0 0.0
    %2198 = vmatprep.subr.mxu0 0.0
    %2199 = vmatpush2.msra.mxu0 0.0
    %2200 = vmatprep.subr.mxu0 0.0
    %2201 = vmatpush2.msra.mxu0 0.0
    %2202 = vmatprep.subr.mxu0 0.0
    %2203 = vmatpush2.msra.mxu0 0.0
    %2204 = vmatprep.subr.mxu0 0.0
    %2205 = vmatpush2.msra.mxu0 0.0
    %2206 = vmatprep.subr.mxu0 0.0
    %2207 = vmatpush2.msra.mxu0 0.0
    %2208 = vmatprep.mubr.f32.mxu0 0.0
    %2209 = vmatmul.mubr.f32.gmra.mxu0 %v2139
    %v2210 = vpop.f32.mrf.mxu0
    %v2211 = vadd.f32 0.0, %v2210
    %v2212 = vpop.f32.mrf.mxu0
    %v2213 = vadd.f32 0.0, %v2212
    %2214 = vmatprep.mubr.f32.mxu0 0.0
    %2215 = vmatmul.mubr.f32.gmra.mxu0 %v2142
    %v2216 = vpop.f32.mrf.mxu0
    %v2217 = vadd.f32 0.0, %v2216
    %v2218 = vpop.f32.mrf.mxu0
    %v2219 = vadd.f32 0.0, %v2218
    %2220 = vdwg.mxu0
    %v2222 = vsel %vm1463, %v1638, 0
    %v2225 = vsel %vm1463, %v1639, 0
    %2227 = vmatprep.subr.mxu0 0.0
    %2228 = vmatpush1.msra.mxu0 0.0
    %2229 = vmatprep.subr.mxu0 0.0
    %2230 = vmatpush1.msra.mxu0 0.0
    %2231 = vmatprep.subr.mxu0 0.0
    %2232 = vmatpush1.msra.mxu0 0.0
    %2233 = vmatprep.subr.mxu0 0.0
    %2234 = vmatpush1.msra.mxu0 0.0
    %2235 = vmatprep.subr.mxu0 0.0
    %2236 = vmatpush1.msra.mxu0 0.0
    %2237 = vmatprep.subr.mxu0 0.0
    %2238 = vmatpush1.msra.mxu0 0.0
    %2239 = vmatprep.subr.mxu0 0.0
    %2240 = vmatpush1.msra.mxu0 0.0
    %2241 = vmatprep.subr.mxu0 0.0
    %2242 = vmatpush1.msra.mxu0 0.0
    %2243 = vmatprep.subr.mxu0 %v238
    %2244 = vmatpush1.msra.mxu0 %v237
    %2245 = vmatprep.subr.mxu0 %v236
    %2246 = vmatpush1.msra.mxu0 %v235
    %2247 = vmatprep.subr.mxu0 %v234
    %2248 = vmatpush1.msra.mxu0 %v233
    %2249 = vmatprep.subr.mxu0 %v232
    %2250 = vmatpush1.msra.mxu0 %v231
    %2251 = vmatprep.subr.mxu0 %v230
    %2252 = vmatpush1.msra.mxu0 %v229
    %2253 = vmatprep.subr.mxu0 %v228
    %2254 = vmatpush1.msra.mxu0 %v227
    %2255 = vmatprep.subr.mxu0 %v226
    %2256 = vmatpush1.msra.mxu0 %v225
    %2257 = vmatprep.subr.mxu0 %v224
    %2258 = vmatpush1.msra.mxu0 %v223
    %2259 = vmatprep.subr.mxu0 0.0
    %2260 = vmatpush2.msra.mxu0 0.0
    %2261 = vmatprep.subr.mxu0 0.0
    %2262 = vmatpush2.msra.mxu0 0.0
    %2263 = vmatprep.subr.mxu0 0.0
    %2264 = vmatpush2.msra.mxu0 0.0
    %2265 = vmatprep.subr.mxu0 0.0
    %2266 = vmatpush2.msra.mxu0 0.0
    %2267 = vmatprep.subr.mxu0 0.0
    %2268 = vmatpush2.msra.mxu0 0.0
    %2269 = vmatprep.subr.mxu0 0.0
    %2270 = vmatpush2.msra.mxu0 0.0
    %2271 = vmatprep.subr.mxu0 0.0
    %2272 = vmatpush2.msra.mxu0 0.0
    %2273 = vmatprep.subr.mxu0 0.0
    %2274 = vmatpush2.msra.mxu0 0.0
    %2275 = vmatprep.subr.mxu0 0.0
    %2276 = vmatpush2.msra.mxu0 0.0
    %2277 = vmatprep.subr.mxu0 0.0
    %2278 = vmatpush2.msra.mxu0 0.0
    %2279 = vmatprep.subr.mxu0 0.0
    %2280 = vmatpush2.msra.mxu0 0.0
    %2281 = vmatprep.subr.mxu0 0.0
    %2282 = vmatpush2.msra.mxu0 0.0
    %2283 = vmatprep.subr.mxu0 0.0
    %2284 = vmatpush2.msra.mxu0 0.0
    %2285 = vmatprep.subr.mxu0 0.0
    %2286 = vmatpush2.msra.mxu0 0.0
    %2287 = vmatprep.subr.mxu0 0.0
    %2288 = vmatpush2.msra.mxu0 0.0
    %2289 = vmatprep.subr.mxu0 0.0
    %2290 = vmatpush2.msra.mxu0 0.0
    %2291 = vmatprep.mubr.f32.mxu0 0.0
    %2292 = vmatmul.mubr.f32.gmra.mxu0 %v2222
    %v2293 = vpop.f32.mrf.mxu0
    %v2294 = vadd.f32 0.0, %v2293
    %v2295 = vpop.f32.mrf.mxu0
    %v2296 = vadd.f32 0.0, %v2295
    %2297 = vmatprep.mubr.f32.mxu0 0.0
    %2298 = vmatmul.mubr.f32.gmra.mxu0 %v2225
    %v2299 = vpop.f32.mrf.mxu0
    %v2300 = vadd.f32 0.0, %v2299
    %v2301 = vpop.f32.mrf.mxu0
    %v2302 = vadd.f32 0.0, %v2301
    %2303 = vdwg.mxu0
    %2304 = vst [vmem:[#allocation10] sm:$0xff] %v1713
    %2305 = vst [vmem:[#allocation10 + $0x8] sm:$0xff] %v1715
    %2306 = vst [vmem:[#allocation10 + $0x10] sm:$0xff] %v1719
    %2307 = vst [vmem:[#allocation10 + $0x18] sm:$0xff] %v1721
    %2308 = vst [vmem:[#allocation10 + $0x20] sm:$0xff] %v1796
    %2309 = vst [vmem:[#allocation10 + $0x28] sm:$0xff] %v1798
    %2310 = vst [vmem:[#allocation10 + $0x30] sm:$0xff] %v1802
    %2311 = vst [vmem:[#allocation10 + $0x38] sm:$0xff] %v1804
    %2312 = vst [vmem:[#allocation10 + $0x40] sm:$0xff] %v1879
    %2313 = vst [vmem:[#allocation10 + $0x48] sm:$0xff] %v1881
    %2314 = vst [vmem:[#allocation10 + $0x50] sm:$0xff] %v1885
    %2315 = vst [vmem:[#allocation10 + $0x58] sm:$0xff] %v1887
    %2316 = vst [vmem:[#allocation10 + $0x60] sm:$0xff] %v1962
    %2317 = vst [vmem:[#allocation10 + $0x68] sm:$0xff] %v1964
    %2318 = vst [vmem:[#allocation10 + $0x70] sm:$0xff] %v1968
    %2319 = vst [vmem:[#allocation10 + $0x78] sm:$0xff] %v1970
    %2320 = vst [vmem:[#allocation10 + $0x80] sm:$0xff] %v2045
    %2321 = vst [vmem:[#allocation10 + $0x88] sm:$0xff] %v2047
    %2322 = vst [vmem:[#allocation10 + $0x90] sm:$0xff] %v2051
    %2323 = vst [vmem:[#allocation10 + $0x98] sm:$0xff] %v2053
    %2324 = vst [vmem:[#allocation10 + $0xa0] sm:$0xff] %v2128
    %2325 = vst [vmem:[#allocation10 + $0xa8] sm:$0xff] %v2130
    %2326 = vst [vmem:[#allocation10 + $0xb0] sm:$0xff] %v2134
    %2327 = vst [vmem:[#allocation10 + $0xb8] sm:$0xff] %v2136
    %2328 = vst [vmem:[#allocation10 + $0xc0] sm:$0xff] %v2211
    %2329 = vst [vmem:[#allocation10 + $0xc8] sm:$0xff] %v2213
    %2330 = vst [vmem:[#allocation10 + $0xd0] sm:$0xff] %v2217
    %2331 = vst [vmem:[#allocation10 + $0xd8] sm:$0xff] %v2219
    %2332 = vst [vmem:[#allocation10 + $0xe0] sm:$0xff] %v2294
    %2333 = vst [vmem:[#allocation10 + $0xe8] sm:$0xff] %v2296
    %2334 = vst [vmem:[#allocation10 + $0xf0] sm:$0xff] %v2300
    %2335 = vst [vmem:[#allocation10 + $0xf8] sm:$0xff] %v2302
    // Predicated region
    $region42: #{attention_pallas.1} parent=1 // pred_check
      _
    $region43: #{attention_pallas.1} parent=1 // pred_check_branch
      %2337 = sbr.rel (0) target = $region45
    $region44: #{attention_pallas.1} parent=1 // pred_region
      %s2339 = ssub.s32 4096, 4096
      %2340 = vsyncadd [#allocation4], %s2339
      %s2341 = sshll.u32 [#allocation10], 4
      %s2342 = int_to_ptr.vmem [resolvable:$true] %s2341
      %2347 = dma.vmem_to_hbm [thread:$0]  %s2342, 4096, %s6, [#allocation4], 256, 256, 16
    $region45: #{attention_pallas.1} parent=1 // pred_fallthru
      _
    // Predicated region
    $region46: #{attention_pallas.1} parent=1 // pred_check
      _
    $region47: #{attention_pallas.1} parent=1 // pred_check_branch
      %2349 = sbr.rel (0) target = $region49
    $region48: #{attention_pallas.1} parent=1 // pred_region
      %2350 = dma.done [#allocation4], 4096
    $region49: #{attention_pallas.1} parent=1 // pred_fallthru
      _
    %2351 = vsyncpa [#allocation3], 1
    %2352 = vsyncpa [#allocation6], 1
    %2353 = vsyncpa [#allocation9], 1
    %2354 = vsyncpa [#allocation4], 1

</llo_original>
